<compile_context>
chip_gen: v6e
topology: v6e:2x2x1
jax: 0.10.0
libtpu: 0.0.40
codegen_flags: <defaults>
</compile_context>

<pallas_src>
import functools

import jax
import jax.numpy as jnp
from jax import lax
from jax.experimental import pallas as pl
from jax.experimental.pallas import tpu as pltpu


# --------------------------------------------------------------------------- #
# Kernels (transposed orientation: features on sublanes, batch on lanes).
# --------------------------------------------------------------------------- #
def _layernorm_cols(out, p2_ref, eps):
    """LayerNorm over axis 0 (feature/sublane axis), two-pass, f32 math."""
    n_inv = 1.0 / out.shape[0]
    mean = jnp.sum(out, axis=0, keepdims=True) * n_inv
    centered = out - mean
    var = jnp.sum(centered * centered, axis=0, keepdims=True) * n_inv
    inv = lax.rsqrt(var + eps)                         # EUP slot (free-ish)
    gamma = p2_ref[:, 1:2]                             # (out_f, 1)
    beta = p2_ref[:, 2:3]
    return centered * inv * gamma + beta


def _fused_kernel(xt_ref, w1ct_ref, p1_ref, w2st_ref, p2_ref, ot_ref,
                  *, eps, precision):
    """[W1|I]^T @ x^T -> bias + floor-ReLU -> [W2;Ws]^T @ . -> LayerNorm."""
    xt = xt_ref[...]                                   # (in_f, bm), native dtype

    # One MXU call producing [fc1(x) ; x] stacked on the feature axis.
    h = jnp.dot(w1ct_ref[...], xt,
                preferred_element_type=jnp.float32, precision=precision)
    # Column 0 of p1 = [b1 ; 0], column 1 = ReLU floor [0 ; -inf]:
    # one VPU max replaces iota+compare+select, identity rows pass through.
    h = jnp.maximum(h + p1_ref[:, 0:1], p1_ref[:, 1:2])

    # Fused fc2 + shortcut: one MXU call, folded bias (b2 + bs) column.
    out = jnp.dot(w2st_ref[...], h.astype(w2st_ref.dtype),
                  preferred_element_type=jnp.float32, precision=precision)
    out = out + p2_ref[:, 0:1]

    # dropout: identity (eval mode)
    ot_ref[...] = _layernorm_cols(out, p2_ref, eps).astype(ot_ref.dtype)


def _plain_kernel(xt_ref, w1t_ref, b1_ref, w2t_ref, wst_ref, p2_ref, ot_ref,
                  *, eps, precision):
    """Fallback (no identity augmentation): 3 MXU calls + VPU residual add."""
    xt = xt_ref[...]                                   # (in_f, bm)
    h = jnp.dot(w1t_ref[...], xt,
                preferred_element_type=jnp.float32, precision=precision)
    h = jnp.maximum(h + b1_ref[...], 0.0)              # (hid_f, bm)
    out = jnp.dot(w2t_ref[...], h.astype(w2t_ref.dtype),
                  preferred_element_type=jnp.float32, precision=precision)
    out = out + jnp.dot(wst_ref[...], xt,
                        preferred_element_type=jnp.float32, precision=precision)
    out = out + p2_ref[:, 0:1]
    # dropout: identity (eval mode)
    ot_ref[...] = _layernorm_cols(out, p2_ref, eps).astype(ot_ref.dtype)


# --------------------------------------------------------------------------- #
# Host-side (static) configuration helpers.
# --------------------------------------------------------------------------- #
def _vmem_cap_bytes():
    """~3/4 of physical VMEM: ~48 MiB on v7x (64 MiB), ~96 MiB on v5e/v6e."""
    cap = 64 << 20                                      # conservative default
    try:
        info = pltpu.get_tpu_info()
        cap = int(getattr(info, "vmem_capacity_bytes", cap))
    except Exception:
        pass
    return (cap * 3) // 4


def _mxu_tile():
    """MXU tile width: 128 on v5e and older, 256 on v6e/v7x."""
    try:
        kind = jax.devices()[0].device_kind.lower()
    except Exception:
        kind = ""
    if any(t in kind for t in ("v2", "v3", "v4", "v5")):
        return 128
    return 256


def _pick_block_b(B, in_f, k_f, out_f, cap_bytes):
    """Prefer one grid step (whole batch). Split along the batch/lane axis
    (128-aligned blocks) only when a single block would not fit VMEM."""
    def usage(bb):
        params = k_f * in_f + 2 * k_f + out_f * k_f + 3 * out_f   # weight blocks
        io = bb * (in_f + out_f)                                   # x / out tiles
        live = bb * (k_f + 3 * out_f)                              # f32 intermediates
        # x2 = double-buffered pipeline copies of params + io (counted once).
        return 4 * (2 * (params + io) + live) + (2 << 20)
    if usage(B) <= cap_bytes:
        return B
    bb = (B // 128) * 128
    while bb >= 128:
        if B % bb == 0 and usage(bb) <= cap_bytes:
            return bb
        bb -= 128
    return B   # give up on splitting; correctness first


# --------------------------------------------------------------------------- #
# Forward pass.
# --------------------------------------------------------------------------- #
@functools.partial(jax.jit,
                   static_argnames=("block_b", "fuse_identity", "vmem_limit"))
def _forward(x, w1, b1, w2, b2, ws, bs, gamma, beta, *,
             block_b, fuse_identity, vmem_limit):
    B, in_f = x.shape
    hid_f = w1.shape[1]
    out_f = w2.shape[1]
    eps = 1e-5
    # HIGHEST precision for f32 inputs: removes the bf16-pass accuracy cliff;
    # the MXU is nowhere near the bottleneck at these shapes.
    precision = lax.Precision.HIGHEST if x.dtype == jnp.float32 else None

    # Transposed (lane-dense) presentation: batch on the 128-lane axis.
    xt = x.T                                                       # (in_f, B)
    p2 = jnp.stack([(b2 + bs).astype(jnp.float32),
                    gamma.astype(jnp.float32),
                    beta.astype(jnp.float32)], axis=1)             # (out_f, 3)

    grid = (B // block_b,)
    x_spec = pl.BlockSpec((in_f, block_b), lambda i: (0, i))
    o_spec = pl.BlockSpec((out_f, block_b), lambda i: (0, i))
    out_shape = jax.ShapeDtypeStruct((out_f, B), x.dtype)
    cparams = pltpu.CompilerParams(
        dimension_semantics=("parallel",),
        vmem_limit_bytes=int(vmem_limit))

    if fuse_identity:
        k_f = hid_f + in_f
        # [W1 | I]^T : one MXU call yields [fc1(x) ; x] on the feature axis.
        w1ct = jnp.concatenate([w1, jnp.eye(in_f, dtype=w1.dtype)], axis=1).T
        # p1 column 0: [b1 ; 0]   column 1: ReLU floor [0 ; -inf]
        p1 = jnp.stack(
            [jnp.concatenate([b1.astype(jnp.float32),
                              jnp.zeros((in_f,), jnp.float32)]),
             jnp.concatenate([jnp.zeros((hid_f,), jnp.float32),
                              jnp.full((in_f,), -jnp.inf, jnp.float32)])],
            axis=1)                                                # (k_f, 2)
        w2st = jnp.concatenate([w2, ws], axis=0).T                 # (out_f, k_f)

        kernel = functools.partial(_fused_kernel, eps=eps, precision=precision)
        out_t = pl.pallas_call(
            kernel,
            out_shape=out_shape,
            grid=grid,
            in_specs=[x_spec,
                      pl.BlockSpec((k_f, in_f), lambda i: (0, 0)),
                      pl.BlockSpec((k_f, 2), lambda i: (0, 0)),
                      pl.BlockSpec((out_f, k_f), lambda i: (0, 0)),
                      pl.BlockSpec((out_f, 3), lambda i: (0, 0))],
            out_specs=o_spec,
            compiler_params=cparams,
        )(xt, w1ct, p1, w2st, p2)
    else:
        kernel = functools.partial(_plain_kernel, eps=eps, precision=precision)
        out_t = pl.pallas_call(
            kernel,
            out_shape=out_shape,
            grid=grid,
            in_specs=[x_spec,
                      pl.BlockSpec((hid_f, in_f), lambda i: (0, 0)),
                      pl.BlockSpec((hid_f, 1), lambda i: (0, 0)),
                      pl.BlockSpec((out_f, hid_f), lambda i: (0, 0)),
                      pl.BlockSpec((out_f, in_f), lambda i: (0, 0)),
                      pl.BlockSpec((out_f, 3), lambda i: (0, 0))],
            out_specs=o_spec,
            compiler_params=cparams,
        )(xt, w1.T, b1.astype(jnp.float32).reshape(hid_f, 1), w2.T, ws.T, p2)

    return out_t.T                                                  # (B, out_f)


def residual_block(x, w1, b1, w2, b2, ws, bs, gamma, beta, *,
                   block_b=None, fuse_identity=None):
    """y = LayerNorm(fc2(relu(fc1(x))) + shortcut(x)); weights given as [in, out]."""
    B, in_f = x.shape
    hid_f = w1.shape[1]
    out_f = w2.shape[1]
    k_f = hid_f + in_f

    if fuse_identity is None:
        # Identity augmentation is only "free" while k = hid+in fits one MXU tile.
        fuse_identity = k_f <= _mxu_tile()
    cap = _vmem_cap_bytes()
    if block_b is None:
        eff_k = k_f if fuse_identity else max(hid_f, in_f)
        block_b = _pick_block_b(B, in_f, eff_k, out_f, cap)
    assert B % block_b == 0, "batch must be divisible by the batch tile"

    return _forward(x, w1, b1, w2, b2, ws, bs, gamma, beta,
                    block_b=int(block_b), fuse_identity=bool(fuse_identity),
                    vmem_limit=int(cap))


# --------------------------------------------------------------------------- #
# Reference + self-test.
# --------------------------------------------------------------------------- #
def reference(x, w1, b1, w2, b2, ws, bs, gamma, beta, eps=1e-5):
    """Pure-JAX reference mirroring the PyTorch module (eval mode)."""
    h = jnp.maximum(x @ w1 + b1, 0.0)
    out = h @ w2 + b2 + (x @ ws + bs)
    mean = out.mean(-1, keepdims=True)
    var = ((out - mean) ** 2).mean(-1, keepdims=True)
    return (out - mean) / jnp.sqrt(var + eps) * gamma + beta


if __name__ == "__main__":
    # Small shapes implied by the module (Linear layers on the last axis).
    B, IN_F, HID_F, OUT_F = 256, 32, 64, 16

    key = jax.random.PRNGKey(0)
    kx, k1, k2, k3, k4, k5, k6 = jax.random.split(key, 7)

    x = jax.random.normal(kx, (B, IN_F), dtype=jnp.float32)
    # PyTorch fc1.weight is (hid, in); we store the transpose (in, hid).
    w1 = jax.random.normal(k1, (IN_F, HID_F), dtype=jnp.float32) * 0.1
    b1 = jax.random.normal(k2, (HID_F,), dtype=jnp.float32) * 0.1
    w2 = jax.random.normal(k3, (HID_F, OUT_F), dtype=jnp.float32) * 0.1
    b2 = jax.random.normal(k4, (OUT_F,), dtype=jnp.float32) * 0.1
    ws = jax.random.normal(k5, (IN_F, OUT_F), dtype=jnp.float32) * 0.1
    bs = jax.random.normal(k6, (OUT_F,), dtype=jnp.float32) * 0.1
    gamma = jnp.ones((OUT_F,), dtype=jnp.float32)
    beta = jnp.zeros((OUT_F,), dtype=jnp.float32)

    ref = reference(x, w1, b1, w2, b2, ws, bs, gamma, beta)

    # Default config: fused (identity-augmented) path, single grid step.
    out = jax.block_until_ready(
        residual_block(x, w1, b1, w2, b2, ws, bs, gamma, beta))
    assert out.shape == (B, OUT_F)
    assert jnp.allclose(out, ref, atol=1e-4, rtol=1e-4), "fused path mismatch"

    # Fallback path (no identity augmentation) — used when k_f exceeds an MXU tile.
    out_plain = jax.block_until_ready(
        residual_block(x, w1, b1, w2, b2, ws, bs, gamma, beta,
                       fuse_identity=False))
    assert jnp.allclose(out_plain, ref, atol=1e-4, rtol=1e-4), "plain path mismatch"

    # Batch-split path (two 128-wide lane blocks) — used only when VMEM-bound.
    out_split = jax.block_until_ready(
        residual_block(x, w1, b1, w2, b2, ws, bs, gamma, beta, block_b=128))
    assert jnp.allclose(out_split, ref, atol=1e-4, rtol=1e-4), "split path mismatch"

    print("KERNEL_OK")
</pallas_src>

<mosaic_0001>
module attributes {stable_mosaic.version = 11 : i64} {
  func.func @_fused_kernel(%arg0: i32, %arg1: memref<32x256xf32, #tpu.memory_space<vmem>>, %arg2: memref<96x32xf32, #tpu.memory_space<vmem>>, %arg3: memref<96x2xf32, #tpu.memory_space<vmem>>, %arg4: memref<16x96xf32, #tpu.memory_space<vmem>>, %arg5: memref<16x3xf32, #tpu.memory_space<vmem>>, %arg6: memref<16x256xf32, #tpu.memory_space<vmem>>) attributes {dimension_semantics = [#tpu.dimension_semantics<parallel>], iteration_bounds = array<i64: 1>, scalar_prefetch = 0 : i64, scratch_operands = 0 : i64, tpu.core_type = #tpu.core_type<tc>, window_params = [{transform_indices = @transform_0, window_bounds = array<i64: 32, 256>}, {pipeline_mode = #tpu.pipeline_mode<synchronous>, transform_indices = @transform_1, window_bounds = array<i64: 96, 32>}, {pipeline_mode = #tpu.pipeline_mode<synchronous>, transform_indices = @transform_2, window_bounds = array<i64: 96, 2>}, {pipeline_mode = #tpu.pipeline_mode<synchronous>, transform_indices = @transform_3, window_bounds = array<i64: 16, 96>}, {pipeline_mode = #tpu.pipeline_mode<synchronous>, transform_indices = @transform_4, window_bounds = array<i64: 16, 3>}, {transform_indices = @transform_5, window_bounds = array<i64: 16, 256>}]} {
    %c0 = arith.constant 0 : index
    %c0_0 = arith.constant 0 : index
    %0 = vector.load %arg1[%c0, %c0_0] : memref<32x256xf32, #tpu.memory_space<vmem>>, vector<32x256xf32>
    %c0_1 = arith.constant 0 : index
    %c0_2 = arith.constant 0 : index
    %1 = vector.load %arg2[%c0_1, %c0_2] : memref<96x32xf32, #tpu.memory_space<vmem>>, vector<96x32xf32>
    %cst = arith.constant dense<0.000000e+00> : vector<96x256xf32>
    %2 = tpu.matmul %1, %0, %cst {dimension_numbers = #tpu.dot_dimension_numbers<[1], [0], [0], [1], [0, 0, 1, 1], [], []>, precision = #tpu.contract_precision<fp32>} : vector<96x32xf32>, vector<32x256xf32>, vector<96x256xf32> -> vector<96x256xf32>
    %c0_3 = arith.constant 0 : index
    %c0_4 = arith.constant 0 : index
    %3 = vector.load %arg3[%c0_3, %c0_4] : memref<96x2xf32, #tpu.memory_space<vmem>>, vector<96x1xf32>
    %4 = vector.broadcast %3 : vector<96x1xf32> to vector<96x256xf32>
    %5 = arith.addf %2, %4 : vector<96x256xf32>
    %c0_5 = arith.constant 0 : index
    %c1 = arith.constant 1 : index
    %6 = vector.load %arg3[%c0_5, %c1] : memref<96x2xf32, #tpu.memory_space<vmem>>, vector<96x1xf32>
    %7 = vector.broadcast %6 : vector<96x1xf32> to vector<96x256xf32>
    %8 = arith.maximumf %5, %7 : vector<96x256xf32>
    %c0_6 = arith.constant 0 : index
    %c0_7 = arith.constant 0 : index
    %9 = vector.load %arg4[%c0_6, %c0_7] : memref<16x96xf32, #tpu.memory_space<vmem>>, vector<16x96xf32>
    %cst_8 = arith.constant dense<0.000000e+00> : vector<16x256xf32>
    %10 = tpu.matmul %9, %8, %cst_8 {dimension_numbers = #tpu.dot_dimension_numbers<[1], [0], [0], [1], [0, 0, 1, 1], [], []>, precision = #tpu.contract_precision<fp32>} : vector<16x96xf32>, vector<96x256xf32>, vector<16x256xf32> -> vector<16x256xf32>
    %c0_9 = arith.constant 0 : index
    %c0_10 = arith.constant 0 : index
    %11 = vector.load %arg5[%c0_9, %c0_10] : memref<16x3xf32, #tpu.memory_space<vmem>>, vector<16x1xf32>
    %12 = vector.broadcast %11 : vector<16x1xf32> to vector<16x256xf32>
    %13 = arith.addf %10, %12 : vector<16x256xf32>
    %cst_11 = arith.constant dense<0.000000e+00> : vector<256xf32>
    %14 = vector.multi_reduction <add>, %13, %cst_11 [0] : vector<16x256xf32> to vector<256xf32>
    %15 = vector.shape_cast %14 : vector<256xf32> to vector<1x256xf32>
    %cst_12 = arith.constant 6.250000e-02 : f32
    %16 = vector.broadcast %cst_12 : f32 to vector<1x256xf32>
    %17 = arith.mulf %15, %16 : vector<1x256xf32>
    %18 = vector.broadcast %17 : vector<1x256xf32> to vector<16x256xf32>
    %19 = arith.subf %13, %18 : vector<16x256xf32>
    %20 = arith.mulf %19, %19 : vector<16x256xf32>
    %cst_13 = arith.constant dense<0.000000e+00> : vector<256xf32>
    %21 = vector.multi_reduction <add>, %20, %cst_13 [0] : vector<16x256xf32> to vector<256xf32>
    %22 = vector.shape_cast %21 : vector<256xf32> to vector<1x256xf32>
    %cst_14 = arith.constant 6.250000e-02 : f32
    %23 = vector.broadcast %cst_14 : f32 to vector<1x256xf32>
    %24 = arith.mulf %22, %23 : vector<1x256xf32>
    %cst_15 = arith.constant 9.99999974E-6 : f32
    %25 = vector.broadcast %cst_15 : f32 to vector<1x256xf32>
    %26 = arith.addf %24, %25 : vector<1x256xf32>
    %27 = math.rsqrt %26 : vector<1x256xf32>
    %c0_16 = arith.constant 0 : index
    %c1_17 = arith.constant 1 : index
    %28 = vector.load %arg5[%c0_16, %c1_17] : memref<16x3xf32, #tpu.memory_space<vmem>>, vector<16x1xf32>
    %c0_18 = arith.constant 0 : index
    %c2 = arith.constant 2 : index
    %29 = vector.load %arg5[%c0_18, %c2] : memref<16x3xf32, #tpu.memory_space<vmem>>, vector<16x1xf32>
    %30 = vector.broadcast %27 : vector<1x256xf32> to vector<16x256xf32>
    %31 = arith.mulf %19, %30 : vector<16x256xf32>
    %32 = vector.broadcast %28 : vector<16x1xf32> to vector<16x256xf32>
    %33 = arith.mulf %31, %32 : vector<16x256xf32>
    %34 = vector.broadcast %29 : vector<16x1xf32> to vector<16x256xf32>
    %35 = arith.addf %33, %34 : vector<16x256xf32>
    %c0_19 = arith.constant 0 : index
    %c0_20 = arith.constant 0 : index
    %36 = vector.load %arg6[%c0_19, %c0_20] : memref<16x256xf32, #tpu.memory_space<vmem>>, vector<16x256xf32>
    tpu.vector_store %arg6[%c0_19, %c0_20], %35 {strides = array<i32>} : memref<16x256xf32, #tpu.memory_space<vmem>>, vector<16x256xf32>,
    return
  }
  func.func @transform_0(%arg0: i32) -> (i32, i32) {
    %c0_i32 = arith.constant 0 : i32
    %c0_i32_0 = arith.constant 0 : i32
    return %c0_i32, %arg0 : i32, i32
  }
  func.func @transform_1(%arg0: i32) -> (i32, i32) {
    %c0_i32 = arith.constant 0 : i32
    %c0_i32_0 = arith.constant 0 : i32
    %c0_i32_1 = arith.constant 0 : i32
    return %c0_i32, %c0_i32_0 : i32, i32
  }
  func.func @transform_2(%arg0: i32) -> (i32, i32) {
    %c0_i32 = arith.constant 0 : i32
    %c0_i32_0 = arith.constant 0 : i32
    %c0_i32_1 = arith.constant 0 : i32
    return %c0_i32, %c0_i32_0 : i32, i32
  }
  func.func @transform_3(%arg0: i32) -> (i32, i32) {
    %c0_i32 = arith.constant 0 : i32
    %c0_i32_0 = arith.constant 0 : i32
    %c0_i32_1 = arith.constant 0 : i32
    return %c0_i32, %c0_i32_0 : i32, i32
  }
  func.func @transform_4(%arg0: i32) -> (i32, i32) {
    %c0_i32 = arith.constant 0 : i32
    %c0_i32_0 = arith.constant 0 : i32
    %c0_i32_1 = arith.constant 0 : i32
    return %c0_i32, %c0_i32_0 : i32, i32
  }
  func.func @transform_5(%arg0: i32) -> (i32, i32) {
    %c0_i32 = arith.constant 0 : i32
    %c0_i32_0 = arith.constant 0 : i32
    return %c0_i32, %arg0 : i32, i32
  }
}

</mosaic_0001>

<llo_original>
// kernel: _forward.1
$region0: #{_forward.1}
  #allocation0 [shape = 'u32[]', space=smem, size = 0x4, offset = 0x4, fixed_abs, tag = 'smem constant byte address 0x4 - core index']
  #allocation1 [shape = 'u32[144,128]{1,0:T(1,128)}', space=vmem, size = 0x12000, scoped, tag = 'internal scratch']
  %s0 = inlined_call_operand.vmem [shape: f32[32,256], index: 0, kind: input, shape index: {}]
  %s1 = inlined_call_operand.vmem [shape: f32[96,32], index: 1, kind: input, shape index: {}]
  %s2 = inlined_call_operand.vmem [shape: f32[96,2], index: 2, kind: input, shape index: {}]
  %s3 = inlined_call_operand.vmem [shape: f32[16,96], index: 3, kind: input, shape index: {}]
  %s4 = inlined_call_operand.vmem [shape: f32[16,3], index: 4, kind: input, shape index: {}]
  %s5 = inlined_call_operand.hbm [shape: f32[16,256], index: 5, kind: output, shape index: {}]
  %s6 = sld [smem:[#allocation0]]
  $region30: #{_forward.1} parent=0
    _
  %s8 = ssub.s32 1, %s6
  %s9 = scalar_select 0, %s8, %s6
  $region1: #{_forward.1} parent=0
    #allocation2 [shape = 'u8[16384]{0}', space=vmem, size = 0x4000, scoped, tag = 'output window, operand 0, single buffered']
    #allocation3 [shape = 's32[1]{0}', space=sflag, size = 0x4, scoped, tag = 'scoped memory for _forward.1']
    %10 = vsyncpa [#allocation3], 0
    // Predicated region
    $region2: #{_forward.1} parent=1 // pred_check
      _
    $region3: #{_forward.1} parent=1 // pred_check_branch
      %12 = sbr.rel (0) target = $region5
    $region4: #{_forward.1} parent=1 // pred_region
      _
    $region5: #{_forward.1} parent=1 // pred_fallthru
      _
    // Predicated region
    $region6: #{_forward.1} parent=1 // pred_check
      _
    $region7: #{_forward.1} parent=1 // pred_check_branch
      %14 = sbr.rel (0) target = $region9
    $region8: #{_forward.1} parent=1 // pred_region
      _
    $region9: #{_forward.1} parent=1 // pred_fallthru
      _
    // Predicated region
    $region10: #{_forward.1} parent=1 // pred_check
      _
    $region11: #{_forward.1} parent=1 // pred_check_branch
      %16 = sbr.rel (0) target = $region13
    $region12: #{_forward.1} parent=1 // pred_region
      _
    $region13: #{_forward.1} parent=1 // pred_fallthru
      _
    // Predicated region
    $region14: #{_forward.1} parent=1 // pred_check
      _
    $region15: #{_forward.1} parent=1 // pred_check_branch
      %18 = sbr.rel (0) target = $region17
    $region16: #{_forward.1} parent=1 // pred_region
      _
    $region17: #{_forward.1} parent=1 // pred_fallthru
      _
    // Predicated region
    $region18: #{_forward.1} parent=1 // pred_check
      _
    $region19: #{_forward.1} parent=1 // pred_check_branch
      %20 = sbr.rel (0) target = $region21
    $region20: #{_forward.1} parent=1 // pred_region
      _
    $region21: #{_forward.1} parent=1 // pred_fallthru
      _
    %v21 = vld [vmem:[%s0] sm:$0xff]
    %v22 = vld [vmem:[%s0 + $0x8] sm:$0xff]
    %v23 = vld [vmem:[%s0 + $0x10] sm:$0xff]
    %v24 = vld [vmem:[%s0 + $0x18] sm:$0xff]
    %v25 = vld [vmem:[%s0 + $0x20] sm:$0xff]
    %v26 = vld [vmem:[%s0 + $0x28] sm:$0xff]
    %v27 = vld [vmem:[%s0 + $0x30] sm:$0xff]
    %v28 = vld [vmem:[%s0 + $0x38] sm:$0xff]
    %v29 = vld [vmem:[%s1] sm:$0xff]
    %v30 = vld [vmem:[%s1 + $0x8] sm:$0xff]
    %v31 = vld [vmem:[%s1 + $0x10] sm:$0xff]
    %v32 = vld [vmem:[%s1 + $0x18] sm:$0xff]
    %v33 = vld [vmem:[%s1 + $0x20] sm:$0xff]
    %v34 = vld [vmem:[%s1 + $0x28] sm:$0xff]
    %v35 = vld [vmem:[%s1 + $0x30] sm:$0xff]
    %v36 = vld [vmem:[%s1 + $0x38] sm:$0xff]
    %v37 = vld [vmem:[%s1 + $0x40] sm:$0xff]
    %v38 = vld [vmem:[%s1 + $0x48] sm:$0xff]
    %v39 = vld [vmem:[%s1 + $0x50] sm:$0xff]
    %v40 = vld [vmem:[%s1 + $0x58] sm:$0xff]
    %v41 = vld [vmem:[%s2] sm:$0xff]
    %v42 = vld [vmem:[%s2 + $0x8] sm:$0xff]
    %v43 = vld [vmem:[%s2 + $0x10] sm:$0xff]
    %v44 = vld [vmem:[%s2 + $0x18] sm:$0xff]
    %v45 = vld [vmem:[%s2 + $0x20] sm:$0xff]
    %v46 = vld [vmem:[%s2 + $0x28] sm:$0xff]
    %v47 = vld [vmem:[%s2 + $0x30] sm:$0xff]
    %v48 = vld [vmem:[%s2 + $0x38] sm:$0xff]
    %v49 = vld [vmem:[%s2 + $0x40] sm:$0xff]
    %v50 = vld [vmem:[%s2 + $0x48] sm:$0xff]
    %v51 = vld [vmem:[%s2 + $0x50] sm:$0xff]
    %v52 = vld [vmem:[%s2 + $0x58] sm:$0xff]
    %54 = vset.pattern.permute.xlu0 0
    %55 = vperm.xlu0 %54, %v41
    %v56 = vpop.permute.xlu0 %55
    %59 = vset.pattern.permute.xlu0 0
    %60 = vperm.xlu0 %59, %v42
    %v61 = vpop.permute.xlu0 %60
    %64 = vset.pattern.permute.xlu0 0
    %65 = vperm.xlu0 %64, %v43
    %v66 = vpop.permute.xlu0 %65
    %69 = vset.pattern.permute.xlu0 0
    %70 = vperm.xlu0 %69, %v44
    %v71 = vpop.permute.xlu0 %70
    %74 = vset.pattern.permute.xlu0 0
    %75 = vperm.xlu0 %74, %v45
    %v76 = vpop.permute.xlu0 %75
    %79 = vset.pattern.permute.xlu0 0
    %80 = vperm.xlu0 %79, %v46
    %v81 = vpop.permute.xlu0 %80
    %84 = vset.pattern.permute.xlu0 0
    %85 = vperm.xlu0 %84, %v47
    %v86 = vpop.permute.xlu0 %85
    %89 = vset.pattern.permute.xlu0 0
    %90 = vperm.xlu0 %89, %v48
    %v91 = vpop.permute.xlu0 %90
    %94 = vset.pattern.permute.xlu0 0
    %95 = vperm.xlu0 %94, %v49
    %v96 = vpop.permute.xlu0 %95
    %99 = vset.pattern.permute.xlu0 0
    %100 = vperm.xlu0 %99, %v50
    %v101 = vpop.permute.xlu0 %100
    %104 = vset.pattern.permute.xlu0 0
    %105 = vperm.xlu0 %104, %v51
    %v106 = vpop.permute.xlu0 %105
    %109 = vset.pattern.permute.xlu0 0
    %110 = vperm.xlu0 %109, %v52
    %v111 = vpop.permute.xlu0 %110
    %vm113 = vcmask 261120
    %v115 = vsel %vm113, %v29, 0
    %v118 = vsel %vm113, %v30, 0
    %v121 = vsel %vm113, %v31, 0
    %v124 = vsel %vm113, %v32, 0
    %v127 = vsel %vm113, %v33, 0
    %v130 = vsel %vm113, %v34, 0
    %v133 = vsel %vm113, %v35, 0
    %v136 = vsel %vm113, %v36, 0
    %v139 = vsel %vm113, %v37, 0
    %v142 = vsel %vm113, %v38, 0
    %v145 = vsel %vm113, %v39, 0
    %v148 = vsel %vm113, %v40, 0
    %150 = vmatprep.subr.mxu0 0.0
    %151 = vmatpush1.msra.mxu0 0.0
    %152 = vmatprep.subr.mxu0 0.0
    %153 = vmatpush1.msra.mxu0 0.0
    %154 = vmatprep.subr.mxu0 0.0
    %155 = vmatpush1.msra.mxu0 0.0
    %156 = vmatprep.subr.mxu0 0.0
    %157 = vmatpush1.msra.mxu0 0.0
    %158 = vmatprep.subr.mxu0 0.0
    %159 = vmatpush1.msra.mxu0 0.0
    %160 = vmatprep.subr.mxu0 0.0
    %161 = vmatpush1.msra.mxu0 0.0
    %162 = vmatprep.subr.mxu0 0.0
    %163 = vmatpush1.msra.mxu0 0.0
    %164 = vmatprep.subr.mxu0 0.0
    %165 = vmatpush1.msra.mxu0 0.0
    %166 = vmatprep.subr.mxu0 0.0
    %167 = vmatpush1.msra.mxu0 0.0
    %168 = vmatprep.subr.mxu0 0.0
    %169 = vmatpush1.msra.mxu0 0.0
    %170 = vmatprep.subr.mxu0 0.0
    %171 = vmatpush1.msra.mxu0 0.0
    %172 = vmatprep.subr.mxu0 0.0
    %173 = vmatpush1.msra.mxu0 0.0
    %v174 = vand.u32 %v28, 4294901760
    %175 = vmatprep.subr.mxu0 %v174
    %v176 = vand.u32 %v27, 4294901760
    %177 = vmatpush1.msra.mxu0 %v176
    %v178 = vand.u32 %v26, 4294901760
    %179 = vmatprep.subr.mxu0 %v178
    %v180 = vand.u32 %v25, 4294901760
    %181 = vmatpush1.msra.mxu0 %v180
    %v182 = vand.u32 %v24, 4294901760
    %183 = vmatprep.subr.mxu0 %v182
    %v184 = vand.u32 %v23, 4294901760
    %185 = vmatpush1.msra.mxu0 %v184
    %v186 = vand.u32 %v22, 4294901760
    %187 = vmatprep.subr.mxu0 %v186
    %v188 = vand.u32 %v21, 4294901760
    %189 = vmatpush1.msra.mxu0 %v188
    %190 = vmatprep.subr.mxu0 0.0
    %191 = vmatpush2.msra.mxu0 0.0
    %192 = vmatprep.subr.mxu0 0.0
    %193 = vmatpush2.msra.mxu0 0.0
    %194 = vmatprep.subr.mxu0 0.0
    %195 = vmatpush2.msra.mxu0 0.0
    %196 = vmatprep.subr.mxu0 0.0
    %197 = vmatpush2.msra.mxu0 0.0
    %198 = vmatprep.subr.mxu0 0.0
    %199 = vmatpush2.msra.mxu0 0.0
    %200 = vmatprep.subr.mxu0 0.0
    %201 = vmatpush2.msra.mxu0 0.0
    %202 = vmatprep.subr.mxu0 0.0
    %203 = vmatpush2.msra.mxu0 0.0
    %204 = vmatprep.subr.mxu0 0.0
    %205 = vmatpush2.msra.mxu0 0.0
    %206 = vmatprep.subr.mxu0 0.0
    %207 = vmatpush2.msra.mxu0 0.0
    %208 = vmatprep.subr.mxu0 0.0
    %209 = vmatpush2.msra.mxu0 0.0
    %210 = vmatprep.subr.mxu0 0.0
    %211 = vmatpush2.msra.mxu0 0.0
    %212 = vmatprep.subr.mxu0 0.0
    %213 = vmatpush2.msra.mxu0 0.0
    %214 = vmatprep.subr.mxu0 0.0
    %215 = vmatpush2.msra.mxu0 0.0
    %216 = vmatprep.subr.mxu0 0.0
    %217 = vmatpush2.msra.mxu0 0.0
    %218 = vmatprep.subr.mxu0 0.0
    %219 = vmatpush2.msra.mxu0 0.0
    %220 = vmatprep.subr.mxu0 0.0
    %221 = vmatpush2.msra.mxu0 0.0
    %222 = vmatprep.mubr.f32.mxu0 0.0
    %v223 = vand.u32 %v115, 4294901760
    %v224 = vsub.f32 %v115, %v223
    %v225 = vand.u32 %v224, 4294901760
    %v226 = vsub.f32 %v224, %v225
    %v227 = vand.u32 %v226, 4294901760
    %228 = vmatmul.mubr.f32.gmra.mxu0 %v227
    %v229 = vpop.f32.mrf.mxu0
    %v230 = vadd.f32 %v56, %v229
    %v231 = vpop.f32.mrf.mxu0
    %v232 = vadd.f32 %v56, %v231
    %233 = vmatprep.mubr.f32.mxu0 0.0
    %v234 = vand.u32 %v118, 4294901760
    %v235 = vsub.f32 %v118, %v234
    %v236 = vand.u32 %v235, 4294901760
    %v237 = vsub.f32 %v235, %v236
    %v238 = vand.u32 %v237, 4294901760
    %239 = vmatmul.mubr.f32.gmra.mxu0 %v238
    %v240 = vpop.f32.mrf.mxu0
    %v241 = vadd.f32 %v61, %v240
    %v242 = vpop.f32.mrf.mxu0
    %v243 = vadd.f32 %v61, %v242
    %244 = vmatprep.mubr.f32.mxu0 0.0
    %v245 = vand.u32 %v121, 4294901760
    %v246 = vsub.f32 %v121, %v245
    %v247 = vand.u32 %v246, 4294901760
    %v248 = vsub.f32 %v246, %v247
    %v249 = vand.u32 %v248, 4294901760
    %250 = vmatmul.mubr.f32.gmra.mxu0 %v249
    %v251 = vpop.f32.mrf.mxu0
    %v252 = vadd.f32 %v66, %v251
    %v253 = vpop.f32.mrf.mxu0
    %v254 = vadd.f32 %v66, %v253
    %255 = vmatprep.mubr.f32.mxu0 0.0
    %v256 = vand.u32 %v124, 4294901760
    %v257 = vsub.f32 %v124, %v256
    %v258 = vand.u32 %v257, 4294901760
    %v259 = vsub.f32 %v257, %v258
    %v260 = vand.u32 %v259, 4294901760
    %261 = vmatmul.mubr.f32.gmra.mxu0 %v260
    %v262 = vpop.f32.mrf.mxu0
    %v263 = vadd.f32 %v71, %v262
    %v264 = vpop.f32.mrf.mxu0
    %v265 = vadd.f32 %v71, %v264
    %266 = vmatprep.mubr.f32.mxu0 0.0
    %v267 = vand.u32 %v127, 4294901760
    %v268 = vsub.f32 %v127, %v267
    %v269 = vand.u32 %v268, 4294901760
    %v270 = vsub.f32 %v268, %v269
    %v271 = vand.u32 %v270, 4294901760
    %272 = vmatmul.mubr.f32.gmra.mxu0 %v271
    %v273 = vpop.f32.mrf.mxu0
    %v274 = vadd.f32 %v76, %v273
    %v275 = vpop.f32.mrf.mxu0
    %v276 = vadd.f32 %v76, %v275
    %277 = vmatprep.mubr.f32.mxu0 0.0
    %v278 = vand.u32 %v130, 4294901760
    %v279 = vsub.f32 %v130, %v278
    %v280 = vand.u32 %v279, 4294901760
    %v281 = vsub.f32 %v279, %v280
    %v282 = vand.u32 %v281, 4294901760
    %283 = vmatmul.mubr.f32.gmra.mxu0 %v282
    %v284 = vpop.f32.mrf.mxu0
    %v285 = vadd.f32 %v81, %v284
    %v286 = vpop.f32.mrf.mxu0
    %v287 = vadd.f32 %v81, %v286
    %288 = vmatprep.mubr.f32.mxu0 0.0
    %v289 = vand.u32 %v133, 4294901760
    %v290 = vsub.f32 %v133, %v289
    %v291 = vand.u32 %v290, 4294901760
    %v292 = vsub.f32 %v290, %v291
    %v293 = vand.u32 %v292, 4294901760
    %294 = vmatmul.mubr.f32.gmra.mxu0 %v293
    %v295 = vpop.f32.mrf.mxu0
    %v296 = vadd.f32 %v86, %v295
    %v297 = vpop.f32.mrf.mxu0
    %v298 = vadd.f32 %v86, %v297
    %299 = vmatprep.mubr.f32.mxu0 0.0
    %v300 = vand.u32 %v136, 4294901760
    %v301 = vsub.f32 %v136, %v300
    %v302 = vand.u32 %v301, 4294901760
    %v303 = vsub.f32 %v301, %v302
    %v304 = vand.u32 %v303, 4294901760
    %305 = vmatmul.mubr.f32.gmra.mxu0 %v304
    %v306 = vpop.f32.mrf.mxu0
    %v307 = vadd.f32 %v91, %v306
    %v308 = vpop.f32.mrf.mxu0
    %v309 = vadd.f32 %v91, %v308
    %310 = vmatprep.mubr.f32.mxu0 0.0
    %v311 = vand.u32 %v139, 4294901760
    %v312 = vsub.f32 %v139, %v311
    %v313 = vand.u32 %v312, 4294901760
    %v314 = vsub.f32 %v312, %v313
    %v315 = vand.u32 %v314, 4294901760
    %316 = vmatmul.mubr.f32.gmra.mxu0 %v315
    %v317 = vpop.f32.mrf.mxu0
    %v318 = vadd.f32 %v96, %v317
    %v319 = vpop.f32.mrf.mxu0
    %v320 = vadd.f32 %v96, %v319
    %321 = vmatprep.mubr.f32.mxu0 0.0
    %v322 = vand.u32 %v142, 4294901760
    %v323 = vsub.f32 %v142, %v322
    %v324 = vand.u32 %v323, 4294901760
    %v325 = vsub.f32 %v323, %v324
    %v326 = vand.u32 %v325, 4294901760
    %327 = vmatmul.mubr.f32.gmra.mxu0 %v326
    %v328 = vpop.f32.mrf.mxu0
    %v329 = vadd.f32 %v101, %v328
    %v330 = vpop.f32.mrf.mxu0
    %v331 = vadd.f32 %v101, %v330
    %332 = vmatprep.mubr.f32.mxu0 0.0
    %v333 = vand.u32 %v145, 4294901760
    %v334 = vsub.f32 %v145, %v333
    %v335 = vand.u32 %v334, 4294901760
    %v336 = vsub.f32 %v334, %v335
    %v337 = vand.u32 %v336, 4294901760
    %338 = vmatmul.mubr.f32.gmra.mxu0 %v337
    %v339 = vpop.f32.mrf.mxu0
    %v340 = vadd.f32 %v106, %v339
    %v341 = vpop.f32.mrf.mxu0
    %v342 = vadd.f32 %v106, %v341
    %343 = vmatprep.mubr.f32.mxu0 0.0
    %v344 = vand.u32 %v148, 4294901760
    %v345 = vsub.f32 %v148, %v344
    %v346 = vand.u32 %v345, 4294901760
    %v347 = vsub.f32 %v345, %v346
    %v348 = vand.u32 %v347, 4294901760
    %349 = vmatmul.mubr.f32.gmra.mxu0 %v348
    %v350 = vpop.f32.mrf.mxu0
    %v351 = vadd.f32 %v111, %v350
    %v352 = vpop.f32.mrf.mxu0
    %v353 = vadd.f32 %v111, %v352
    %354 = vdwg.mxu0
    %355 = vmatprep.subr.mxu0 0.0
    %356 = vmatpush1.msra.mxu0 0.0
    %357 = vmatprep.subr.mxu0 0.0
    %358 = vmatpush1.msra.mxu0 0.0
    %359 = vmatprep.subr.mxu0 0.0
    %360 = vmatpush1.msra.mxu0 0.0
    %361 = vmatprep.subr.mxu0 0.0
    %362 = vmatpush1.msra.mxu0 0.0
    %363 = vmatprep.subr.mxu0 0.0
    %364 = vmatpush1.msra.mxu0 0.0
    %365 = vmatprep.subr.mxu0 0.0
    %366 = vmatpush1.msra.mxu0 0.0
    %367 = vmatprep.subr.mxu0 0.0
    %368 = vmatpush1.msra.mxu0 0.0
    %369 = vmatprep.subr.mxu0 0.0
    %370 = vmatpush1.msra.mxu0 0.0
    %371 = vmatprep.subr.mxu0 0.0
    %372 = vmatpush1.msra.mxu0 0.0
    %373 = vmatprep.subr.mxu0 0.0
    %374 = vmatpush1.msra.mxu0 0.0
    %375 = vmatprep.subr.mxu0 0.0
    %376 = vmatpush1.msra.mxu0 0.0
    %377 = vmatprep.subr.mxu0 0.0
    %378 = vmatpush1.msra.mxu0 0.0
    %v379 = vand.u32 %v28, 4294901760
    %v380 = vsub.f32 %v28, %v379
    %v381 = vand.u32 %v380, 4294901760
    %v382 = vsub.f32 %v380, %v381
    %v383 = vand.u32 %v382, 4294901760
    %384 = vmatprep.subr.mxu0 %v383
    %v385 = vand.u32 %v27, 4294901760
    %v386 = vsub.f32 %v27, %v385
    %v387 = vand.u32 %v386, 4294901760
    %v388 = vsub.f32 %v386, %v387
    %v389 = vand.u32 %v388, 4294901760
    %390 = vmatpush1.msra.mxu0 %v389
    %v391 = vand.u32 %v26, 4294901760
    %v392 = vsub.f32 %v26, %v391
    %v393 = vand.u32 %v392, 4294901760
    %v394 = vsub.f32 %v392, %v393
    %v395 = vand.u32 %v394, 4294901760
    %396 = vmatprep.subr.mxu0 %v395
    %v397 = vand.u32 %v25, 4294901760
    %v398 = vsub.f32 %v25, %v397
    %v399 = vand.u32 %v398, 4294901760
    %v400 = vsub.f32 %v398, %v399
    %v401 = vand.u32 %v400, 4294901760
    %402 = vmatpush1.msra.mxu0 %v401
    %v403 = vand.u32 %v24, 4294901760
    %v404 = vsub.f32 %v24, %v403
    %v405 = vand.u32 %v404, 4294901760
    %v406 = vsub.f32 %v404, %v405
    %v407 = vand.u32 %v406, 4294901760
    %408 = vmatprep.subr.mxu0 %v407
    %v409 = vand.u32 %v23, 4294901760
    %v410 = vsub.f32 %v23, %v409
    %v411 = vand.u32 %v410, 4294901760
    %v412 = vsub.f32 %v410, %v411
    %v413 = vand.u32 %v412, 4294901760
    %414 = vmatpush1.msra.mxu0 %v413
    %v415 = vand.u32 %v22, 4294901760
    %v416 = vsub.f32 %v22, %v415
    %v417 = vand.u32 %v416, 4294901760
    %v418 = vsub.f32 %v416, %v417
    %v419 = vand.u32 %v418, 4294901760
    %420 = vmatprep.subr.mxu0 %v419
    %v421 = vand.u32 %v21, 4294901760
    %v422 = vsub.f32 %v21, %v421
    %v423 = vand.u32 %v422, 4294901760
    %v424 = vsub.f32 %v422, %v423
    %v425 = vand.u32 %v424, 4294901760
    %426 = vmatpush1.msra.mxu0 %v425
    %427 = vmatprep.subr.mxu0 0.0
    %428 = vmatpush2.msra.mxu0 0.0
    %429 = vmatprep.subr.mxu0 0.0
    %430 = vmatpush2.msra.mxu0 0.0
    %431 = vmatprep.subr.mxu0 0.0
    %432 = vmatpush2.msra.mxu0 0.0
    %433 = vmatprep.subr.mxu0 0.0
    %434 = vmatpush2.msra.mxu0 0.0
    %435 = vmatprep.subr.mxu0 0.0
    %436 = vmatpush2.msra.mxu0 0.0
    %437 = vmatprep.subr.mxu0 0.0
    %438 = vmatpush2.msra.mxu0 0.0
    %439 = vmatprep.subr.mxu0 0.0
    %440 = vmatpush2.msra.mxu0 0.0
    %441 = vmatprep.subr.mxu0 0.0
    %442 = vmatpush2.msra.mxu0 0.0
    %443 = vmatprep.subr.mxu0 0.0
    %444 = vmatpush2.msra.mxu0 0.0
    %445 = vmatprep.subr.mxu0 0.0
    %446 = vmatpush2.msra.mxu0 0.0
    %447 = vmatprep.subr.mxu0 0.0
    %448 = vmatpush2.msra.mxu0 0.0
    %449 = vmatprep.subr.mxu0 0.0
    %450 = vmatpush2.msra.mxu0 0.0
    %451 = vmatprep.subr.mxu0 0.0
    %452 = vmatpush2.msra.mxu0 0.0
    %453 = vmatprep.subr.mxu0 0.0
    %454 = vmatpush2.msra.mxu0 0.0
    %455 = vmatprep.subr.mxu0 0.0
    %456 = vmatpush2.msra.mxu0 0.0
    %457 = vmatprep.subr.mxu0 0.0
    %458 = vmatpush2.msra.mxu0 0.0
    %459 = vmatprep.mubr.f32.mxu0 0.0
    %v460 = vand.u32 %v115, 4294901760
    %461 = vmatmul.mubr.f32.gmra.mxu0 %v460
    %v462 = vpop.f32.mrf.mxu0
    %v463 = vadd.f32 %v230, %v462
    %v464 = vpop.f32.mrf.mxu0
    %v465 = vadd.f32 %v232, %v464
    %466 = vmatprep.mubr.f32.mxu0 0.0
    %v467 = vand.u32 %v118, 4294901760
    %468 = vmatmul.mubr.f32.gmra.mxu0 %v467
    %v469 = vpop.f32.mrf.mxu0
    %v470 = vadd.f32 %v241, %v469
    %v471 = vpop.f32.mrf.mxu0
    %v472 = vadd.f32 %v243, %v471
    %473 = vmatprep.mubr.f32.mxu0 0.0
    %v474 = vand.u32 %v121, 4294901760
    %475 = vmatmul.mubr.f32.gmra.mxu0 %v474
    %v476 = vpop.f32.mrf.mxu0
    %v477 = vadd.f32 %v252, %v476
    %v478 = vpop.f32.mrf.mxu0
    %v479 = vadd.f32 %v254, %v478
    %480 = vmatprep.mubr.f32.mxu0 0.0
    %v481 = vand.u32 %v124, 4294901760
    %482 = vmatmul.mubr.f32.gmra.mxu0 %v481
    %v483 = vpop.f32.mrf.mxu0
    %v484 = vadd.f32 %v263, %v483
    %v485 = vpop.f32.mrf.mxu0
    %v486 = vadd.f32 %v265, %v485
    %487 = vmatprep.mubr.f32.mxu0 0.0
    %v488 = vand.u32 %v127, 4294901760
    %489 = vmatmul.mubr.f32.gmra.mxu0 %v488
    %v490 = vpop.f32.mrf.mxu0
    %v491 = vadd.f32 %v274, %v490
    %v492 = vpop.f32.mrf.mxu0
    %v493 = vadd.f32 %v276, %v492
    %494 = vmatprep.mubr.f32.mxu0 0.0
    %v495 = vand.u32 %v130, 4294901760
    %496 = vmatmul.mubr.f32.gmra.mxu0 %v495
    %v497 = vpop.f32.mrf.mxu0
    %v498 = vadd.f32 %v285, %v497
    %v499 = vpop.f32.mrf.mxu0
    %v500 = vadd.f32 %v287, %v499
    %501 = vmatprep.mubr.f32.mxu0 0.0
    %v502 = vand.u32 %v133, 4294901760
    %503 = vmatmul.mubr.f32.gmra.mxu0 %v502
    %v504 = vpop.f32.mrf.mxu0
    %v505 = vadd.f32 %v296, %v504
    %v506 = vpop.f32.mrf.mxu0
    %v507 = vadd.f32 %v298, %v506
    %508 = vmatprep.mubr.f32.mxu0 0.0
    %v509 = vand.u32 %v136, 4294901760
    %510 = vmatmul.mubr.f32.gmra.mxu0 %v509
    %v511 = vpop.f32.mrf.mxu0
    %v512 = vadd.f32 %v307, %v511
    %v513 = vpop.f32.mrf.mxu0
    %v514 = vadd.f32 %v309, %v513
    %515 = vmatprep.mubr.f32.mxu0 0.0
    %v516 = vand.u32 %v139, 4294901760
    %517 = vmatmul.mubr.f32.gmra.mxu0 %v516
    %v518 = vpop.f32.mrf.mxu0
    %v519 = vadd.f32 %v318, %v518
    %v520 = vpop.f32.mrf.mxu0
    %v521 = vadd.f32 %v320, %v520
    %522 = vmatprep.mubr.f32.mxu0 0.0
    %v523 = vand.u32 %v142, 4294901760
    %524 = vmatmul.mubr.f32.gmra.mxu0 %v523
    %v525 = vpop.f32.mrf.mxu0
    %v526 = vadd.f32 %v329, %v525
    %v527 = vpop.f32.mrf.mxu0
    %v528 = vadd.f32 %v331, %v527
    %529 = vmatprep.mubr.f32.mxu0 0.0
    %v530 = vand.u32 %v145, 4294901760
    %531 = vmatmul.mubr.f32.gmra.mxu0 %v530
    %v532 = vpop.f32.mrf.mxu0
    %v533 = vadd.f32 %v340, %v532
    %v534 = vpop.f32.mrf.mxu0
    %v535 = vadd.f32 %v342, %v534
    %536 = vmatprep.mubr.f32.mxu0 0.0
    %v537 = vand.u32 %v148, 4294901760
    %538 = vmatmul.mubr.f32.gmra.mxu0 %v537
    %v539 = vpop.f32.mrf.mxu0
    %v540 = vadd.f32 %v351, %v539
    %v541 = vpop.f32.mrf.mxu0
    %v542 = vadd.f32 %v353, %v541
    %543 = vdwg.mxu0
    %544 = vmatprep.subr.mxu0 0.0
    %545 = vmatpush1.msra.mxu0 0.0
    %546 = vmatprep.subr.mxu0 0.0
    %547 = vmatpush1.msra.mxu0 0.0
    %548 = vmatprep.subr.mxu0 0.0
    %549 = vmatpush1.msra.mxu0 0.0
    %550 = vmatprep.subr.mxu0 0.0
    %551 = vmatpush1.msra.mxu0 0.0
    %552 = vmatprep.subr.mxu0 0.0
    %553 = vmatpush1.msra.mxu0 0.0
    %554 = vmatprep.subr.mxu0 0.0
    %555 = vmatpush1.msra.mxu0 0.0
    %556 = vmatprep.subr.mxu0 0.0
    %557 = vmatpush1.msra.mxu0 0.0
    %558 = vmatprep.subr.mxu0 0.0
    %559 = vmatpush1.msra.mxu0 0.0
    %560 = vmatprep.subr.mxu0 0.0
    %561 = vmatpush1.msra.mxu0 0.0
    %562 = vmatprep.subr.mxu0 0.0
    %563 = vmatpush1.msra.mxu0 0.0
    %564 = vmatprep.subr.mxu0 0.0
    %565 = vmatpush1.msra.mxu0 0.0
    %566 = vmatprep.subr.mxu0 0.0
    %567 = vmatpush1.msra.mxu0 0.0
    %v568 = vand.u32 %v28, 4294901760
    %v569 = vsub.f32 %v28, %v568
    %570 = vmatprep.subr.mxu0 %v569
    %v571 = vand.u32 %v27, 4294901760
    %v572 = vsub.f32 %v27, %v571
    %573 = vmatpush1.msra.mxu0 %v572
    %v574 = vand.u32 %v26, 4294901760
    %v575 = vsub.f32 %v26, %v574
    %576 = vmatprep.subr.mxu0 %v575
    %v577 = vand.u32 %v25, 4294901760
    %v578 = vsub.f32 %v25, %v577
    %579 = vmatpush1.msra.mxu0 %v578
    %v580 = vand.u32 %v24, 4294901760
    %v581 = vsub.f32 %v24, %v580
    %582 = vmatprep.subr.mxu0 %v581
    %v583 = vand.u32 %v23, 4294901760
    %v584 = vsub.f32 %v23, %v583
    %585 = vmatpush1.msra.mxu0 %v584
    %v586 = vand.u32 %v22, 4294901760
    %v587 = vsub.f32 %v22, %v586
    %588 = vmatprep.subr.mxu0 %v587
    %v589 = vand.u32 %v21, 4294901760
    %v590 = vsub.f32 %v21, %v589
    %591 = vmatpush1.msra.mxu0 %v590
    %592 = vmatprep.subr.mxu0 0.0
    %593 = vmatpush2.msra.mxu0 0.0
    %594 = vmatprep.subr.mxu0 0.0
    %595 = vmatpush2.msra.mxu0 0.0
    %596 = vmatprep.subr.mxu0 0.0
    %597 = vmatpush2.msra.mxu0 0.0
    %598 = vmatprep.subr.mxu0 0.0
    %599 = vmatpush2.msra.mxu0 0.0
    %600 = vmatprep.subr.mxu0 0.0
    %601 = vmatpush2.msra.mxu0 0.0
    %602 = vmatprep.subr.mxu0 0.0
    %603 = vmatpush2.msra.mxu0 0.0
    %604 = vmatprep.subr.mxu0 0.0
    %605 = vmatpush2.msra.mxu0 0.0
    %606 = vmatprep.subr.mxu0 0.0
    %607 = vmatpush2.msra.mxu0 0.0
    %608 = vmatprep.subr.mxu0 0.0
    %609 = vmatpush2.msra.mxu0 0.0
    %610 = vmatprep.subr.mxu0 0.0
    %611 = vmatpush2.msra.mxu0 0.0
    %612 = vmatprep.subr.mxu0 0.0
    %613 = vmatpush2.msra.mxu0 0.0
    %614 = vmatprep.subr.mxu0 0.0
    %615 = vmatpush2.msra.mxu0 0.0
    %616 = vmatprep.subr.mxu0 0.0
    %617 = vmatpush2.msra.mxu0 0.0
    %618 = vmatprep.subr.mxu0 0.0
    %619 = vmatpush2.msra.mxu0 0.0
    %620 = vmatprep.subr.mxu0 0.0
    %621 = vmatpush2.msra.mxu0 0.0
    %622 = vmatprep.subr.mxu0 0.0
    %623 = vmatpush2.msra.mxu0 0.0
    %624 = vmatprep.mubr.f32.mxu0 0.0
    %v625 = vand.u32 %v115, 4294901760
    %v626 = vsub.f32 %v115, %v625
    %627 = vmatmul.mubr.f32.gmra.mxu0 %v626
    %v628 = vpop.f32.mrf.mxu0
    %v629 = vadd.f32 %v463, %v628
    %v630 = vpop.f32.mrf.mxu0
    %v631 = vadd.f32 %v465, %v630
    %632 = vmatprep.mubr.f32.mxu0 0.0
    %v633 = vand.u32 %v118, 4294901760
    %v634 = vsub.f32 %v118, %v633
    %635 = vmatmul.mubr.f32.gmra.mxu0 %v634
    %v636 = vpop.f32.mrf.mxu0
    %v637 = vadd.f32 %v470, %v636
    %v638 = vpop.f32.mrf.mxu0
    %v639 = vadd.f32 %v472, %v638
    %640 = vmatprep.mubr.f32.mxu0 0.0
    %v641 = vand.u32 %v121, 4294901760
    %v642 = vsub.f32 %v121, %v641
    %643 = vmatmul.mubr.f32.gmra.mxu0 %v642
    %v644 = vpop.f32.mrf.mxu0
    %v645 = vadd.f32 %v477, %v644
    %v646 = vpop.f32.mrf.mxu0
    %v647 = vadd.f32 %v479, %v646
    %648 = vmatprep.mubr.f32.mxu0 0.0
    %v649 = vand.u32 %v124, 4294901760
    %v650 = vsub.f32 %v124, %v649
    %651 = vmatmul.mubr.f32.gmra.mxu0 %v650
    %v652 = vpop.f32.mrf.mxu0
    %v653 = vadd.f32 %v484, %v652
    %v654 = vpop.f32.mrf.mxu0
    %v655 = vadd.f32 %v486, %v654
    %656 = vmatprep.mubr.f32.mxu0 0.0
    %v657 = vand.u32 %v127, 4294901760
    %v658 = vsub.f32 %v127, %v657
    %659 = vmatmul.mubr.f32.gmra.mxu0 %v658
    %v660 = vpop.f32.mrf.mxu0
    %v661 = vadd.f32 %v491, %v660
    %v662 = vpop.f32.mrf.mxu0
    %v663 = vadd.f32 %v493, %v662
    %664 = vmatprep.mubr.f32.mxu0 0.0
    %v665 = vand.u32 %v130, 4294901760
    %v666 = vsub.f32 %v130, %v665
    %667 = vmatmul.mubr.f32.gmra.mxu0 %v666
    %v668 = vpop.f32.mrf.mxu0
    %v669 = vadd.f32 %v498, %v668
    %v670 = vpop.f32.mrf.mxu0
    %v671 = vadd.f32 %v500, %v670
    %672 = vmatprep.mubr.f32.mxu0 0.0
    %v673 = vand.u32 %v133, 4294901760
    %v674 = vsub.f32 %v133, %v673
    %675 = vmatmul.mubr.f32.gmra.mxu0 %v674
    %v676 = vpop.f32.mrf.mxu0
    %v677 = vadd.f32 %v505, %v676
    %v678 = vpop.f32.mrf.mxu0
    %v679 = vadd.f32 %v507, %v678
    %680 = vmatprep.mubr.f32.mxu0 0.0
    %v681 = vand.u32 %v136, 4294901760
    %v682 = vsub.f32 %v136, %v681
    %683 = vmatmul.mubr.f32.gmra.mxu0 %v682
    %v684 = vpop.f32.mrf.mxu0
    %v685 = vadd.f32 %v512, %v684
    %v686 = vpop.f32.mrf.mxu0
    %v687 = vadd.f32 %v514, %v686
    %688 = vmatprep.mubr.f32.mxu0 0.0
    %v689 = vand.u32 %v139, 4294901760
    %v690 = vsub.f32 %v139, %v689
    %691 = vmatmul.mubr.f32.gmra.mxu0 %v690
    %v692 = vpop.f32.mrf.mxu0
    %v693 = vadd.f32 %v519, %v692
    %v694 = vpop.f32.mrf.mxu0
    %v695 = vadd.f32 %v521, %v694
    %696 = vmatprep.mubr.f32.mxu0 0.0
    %v697 = vand.u32 %v142, 4294901760
    %v698 = vsub.f32 %v142, %v697
    %699 = vmatmul.mubr.f32.gmra.mxu0 %v698
    %v700 = vpop.f32.mrf.mxu0
    %v701 = vadd.f32 %v526, %v700
    %v702 = vpop.f32.mrf.mxu0
    %v703 = vadd.f32 %v528, %v702
    %704 = vmatprep.mubr.f32.mxu0 0.0
    %v705 = vand.u32 %v145, 4294901760
    %v706 = vsub.f32 %v145, %v705
    %707 = vmatmul.mubr.f32.gmra.mxu0 %v706
    %v708 = vpop.f32.mrf.mxu0
    %v709 = vadd.f32 %v533, %v708
    %v710 = vpop.f32.mrf.mxu0
    %v711 = vadd.f32 %v535, %v710
    %712 = vmatprep.mubr.f32.mxu0 0.0
    %v713 = vand.u32 %v148, 4294901760
    %v714 = vsub.f32 %v148, %v713
    %715 = vmatmul.mubr.f32.gmra.mxu0 %v714
    %v716 = vpop.f32.mrf.mxu0
    %v717 = vadd.f32 %v540, %v716
    %v718 = vpop.f32.mrf.mxu0
    %v719 = vadd.f32 %v542, %v718
    %720 = vdwg.mxu0
    %721 = vmatprep.subr.mxu0 0.0
    %722 = vmatpush1.msra.mxu0 0.0
    %723 = vmatprep.subr.mxu0 0.0
    %724 = vmatpush1.msra.mxu0 0.0
    %725 = vmatprep.subr.mxu0 0.0
    %726 = vmatpush1.msra.mxu0 0.0
    %727 = vmatprep.subr.mxu0 0.0
    %728 = vmatpush1.msra.mxu0 0.0
    %729 = vmatprep.subr.mxu0 0.0
    %730 = vmatpush1.msra.mxu0 0.0
    %731 = vmatprep.subr.mxu0 0.0
    %732 = vmatpush1.msra.mxu0 0.0
    %733 = vmatprep.subr.mxu0 0.0
    %734 = vmatpush1.msra.mxu0 0.0
    %735 = vmatprep.subr.mxu0 0.0
    %736 = vmatpush1.msra.mxu0 0.0
    %737 = vmatprep.subr.mxu0 0.0
    %738 = vmatpush1.msra.mxu0 0.0
    %739 = vmatprep.subr.mxu0 0.0
    %740 = vmatpush1.msra.mxu0 0.0
    %741 = vmatprep.subr.mxu0 0.0
    %742 = vmatpush1.msra.mxu0 0.0
    %743 = vmatprep.subr.mxu0 0.0
    %744 = vmatpush1.msra.mxu0 0.0
    %v745 = vand.u32 %v28, 4294901760
    %746 = vmatprep.subr.mxu0 %v745
    %v747 = vand.u32 %v27, 4294901760
    %748 = vmatpush1.msra.mxu0 %v747
    %v749 = vand.u32 %v26, 4294901760
    %750 = vmatprep.subr.mxu0 %v749
    %v751 = vand.u32 %v25, 4294901760
    %752 = vmatpush1.msra.mxu0 %v751
    %v753 = vand.u32 %v24, 4294901760
    %754 = vmatprep.subr.mxu0 %v753
    %v755 = vand.u32 %v23, 4294901760
    %756 = vmatpush1.msra.mxu0 %v755
    %v757 = vand.u32 %v22, 4294901760
    %758 = vmatprep.subr.mxu0 %v757
    %v759 = vand.u32 %v21, 4294901760
    %760 = vmatpush1.msra.mxu0 %v759
    %761 = vmatprep.subr.mxu0 0.0
    %762 = vmatpush2.msra.mxu0 0.0
    %763 = vmatprep.subr.mxu0 0.0
    %764 = vmatpush2.msra.mxu0 0.0
    %765 = vmatprep.subr.mxu0 0.0
    %766 = vmatpush2.msra.mxu0 0.0
    %767 = vmatprep.subr.mxu0 0.0
    %768 = vmatpush2.msra.mxu0 0.0
    %769 = vmatprep.subr.mxu0 0.0
    %770 = vmatpush2.msra.mxu0 0.0
    %771 = vmatprep.subr.mxu0 0.0
    %772 = vmatpush2.msra.mxu0 0.0
    %773 = vmatprep.subr.mxu0 0.0
    %774 = vmatpush2.msra.mxu0 0.0
    %775 = vmatprep.subr.mxu0 0.0
    %776 = vmatpush2.msra.mxu0 0.0
    %777 = vmatprep.subr.mxu0 0.0
    %778 = vmatpush2.msra.mxu0 0.0
    %779 = vmatprep.subr.mxu0 0.0
    %780 = vmatpush2.msra.mxu0 0.0
    %781 = vmatprep.subr.mxu0 0.0
    %782 = vmatpush2.msra.mxu0 0.0
    %783 = vmatprep.subr.mxu0 0.0
    %784 = vmatpush2.msra.mxu0 0.0
    %785 = vmatprep.subr.mxu0 0.0
    %786 = vmatpush2.msra.mxu0 0.0
    %787 = vmatprep.subr.mxu0 0.0
    %788 = vmatpush2.msra.mxu0 0.0
    %789 = vmatprep.subr.mxu0 0.0
    %790 = vmatpush2.msra.mxu0 0.0
    %791 = vmatprep.subr.mxu0 0.0
    %792 = vmatpush2.msra.mxu0 0.0
    %793 = vmatprep.mubr.f32.mxu0 0.0
    %v794 = vand.u32 %v115, 4294901760
    %v795 = vsub.f32 %v115, %v794
    %v796 = vand.u32 %v795, 4294901760
    %797 = vmatmul.mubr.f32.gmra.mxu0 %v796
    %v798 = vpop.f32.mrf.mxu0
    %v799 = vadd.f32 %v629, %v798
    %v800 = vpop.f32.mrf.mxu0
    %v801 = vadd.f32 %v631, %v800
    %802 = vmatprep.mubr.f32.mxu0 0.0
    %v803 = vand.u32 %v118, 4294901760
    %v804 = vsub.f32 %v118, %v803
    %v805 = vand.u32 %v804, 4294901760
    %806 = vmatmul.mubr.f32.gmra.mxu0 %v805
    %v807 = vpop.f32.mrf.mxu0
    %v808 = vadd.f32 %v637, %v807
    %v809 = vpop.f32.mrf.mxu0
    %v810 = vadd.f32 %v639, %v809
    %811 = vmatprep.mubr.f32.mxu0 0.0
    %v812 = vand.u32 %v121, 4294901760
    %v813 = vsub.f32 %v121, %v812
    %v814 = vand.u32 %v813, 4294901760
    %815 = vmatmul.mubr.f32.gmra.mxu0 %v814
    %v816 = vpop.f32.mrf.mxu0
    %v817 = vadd.f32 %v645, %v816
    %v818 = vpop.f32.mrf.mxu0
    %v819 = vadd.f32 %v647, %v818
    %820 = vmatprep.mubr.f32.mxu0 0.0
    %v821 = vand.u32 %v124, 4294901760
    %v822 = vsub.f32 %v124, %v821
    %v823 = vand.u32 %v822, 4294901760
    %824 = vmatmul.mubr.f32.gmra.mxu0 %v823
    %v825 = vpop.f32.mrf.mxu0
    %v826 = vadd.f32 %v653, %v825
    %v827 = vpop.f32.mrf.mxu0
    %v828 = vadd.f32 %v655, %v827
    %829 = vmatprep.mubr.f32.mxu0 0.0
    %v830 = vand.u32 %v127, 4294901760
    %v831 = vsub.f32 %v127, %v830
    %v832 = vand.u32 %v831, 4294901760
    %833 = vmatmul.mubr.f32.gmra.mxu0 %v832
    %v834 = vpop.f32.mrf.mxu0
    %v835 = vadd.f32 %v661, %v834
    %v836 = vpop.f32.mrf.mxu0
    %v837 = vadd.f32 %v663, %v836
    %838 = vmatprep.mubr.f32.mxu0 0.0
    %v839 = vand.u32 %v130, 4294901760
    %v840 = vsub.f32 %v130, %v839
    %v841 = vand.u32 %v840, 4294901760
    %842 = vmatmul.mubr.f32.gmra.mxu0 %v841
    %v843 = vpop.f32.mrf.mxu0
    %v844 = vadd.f32 %v669, %v843
    %v845 = vpop.f32.mrf.mxu0
    %v846 = vadd.f32 %v671, %v845
    %847 = vmatprep.mubr.f32.mxu0 0.0
    %v848 = vand.u32 %v133, 4294901760
    %v849 = vsub.f32 %v133, %v848
    %v850 = vand.u32 %v849, 4294901760
    %851 = vmatmul.mubr.f32.gmra.mxu0 %v850
    %v852 = vpop.f32.mrf.mxu0
    %v853 = vadd.f32 %v677, %v852
    %v854 = vpop.f32.mrf.mxu0
    %v855 = vadd.f32 %v679, %v854
    %856 = vmatprep.mubr.f32.mxu0 0.0
    %v857 = vand.u32 %v136, 4294901760
    %v858 = vsub.f32 %v136, %v857
    %v859 = vand.u32 %v858, 4294901760
    %860 = vmatmul.mubr.f32.gmra.mxu0 %v859
    %v861 = vpop.f32.mrf.mxu0
    %v862 = vadd.f32 %v685, %v861
    %v863 = vpop.f32.mrf.mxu0
    %v864 = vadd.f32 %v687, %v863
    %865 = vmatprep.mubr.f32.mxu0 0.0
    %v866 = vand.u32 %v139, 4294901760
    %v867 = vsub.f32 %v139, %v866
    %v868 = vand.u32 %v867, 4294901760
    %869 = vmatmul.mubr.f32.gmra.mxu0 %v868
    %v870 = vpop.f32.mrf.mxu0
    %v871 = vadd.f32 %v693, %v870
    %v872 = vpop.f32.mrf.mxu0
    %v873 = vadd.f32 %v695, %v872
    %874 = vmatprep.mubr.f32.mxu0 0.0
    %v875 = vand.u32 %v142, 4294901760
    %v876 = vsub.f32 %v142, %v875
    %v877 = vand.u32 %v876, 4294901760
    %878 = vmatmul.mubr.f32.gmra.mxu0 %v877
    %v879 = vpop.f32.mrf.mxu0
    %v880 = vadd.f32 %v701, %v879
    %v881 = vpop.f32.mrf.mxu0
    %v882 = vadd.f32 %v703, %v881
    %883 = vmatprep.mubr.f32.mxu0 0.0
    %v884 = vand.u32 %v145, 4294901760
    %v885 = vsub.f32 %v145, %v884
    %v886 = vand.u32 %v885, 4294901760
    %887 = vmatmul.mubr.f32.gmra.mxu0 %v886
    %v888 = vpop.f32.mrf.mxu0
    %v889 = vadd.f32 %v709, %v888
    %v890 = vpop.f32.mrf.mxu0
    %v891 = vadd.f32 %v711, %v890
    %892 = vmatprep.mubr.f32.mxu0 0.0
    %v893 = vand.u32 %v148, 4294901760
    %v894 = vsub.f32 %v148, %v893
    %v895 = vand.u32 %v894, 4294901760
    %896 = vmatmul.mubr.f32.gmra.mxu0 %v895
    %v897 = vpop.f32.mrf.mxu0
    %v898 = vadd.f32 %v717, %v897
    %v899 = vpop.f32.mrf.mxu0
    %v900 = vadd.f32 %v719, %v899
    %901 = vdwg.mxu0
    %902 = vmatprep.subr.mxu0 0.0
    %903 = vmatpush1.msra.mxu0 0.0
    %904 = vmatprep.subr.mxu0 0.0
    %905 = vmatpush1.msra.mxu0 0.0
    %906 = vmatprep.subr.mxu0 0.0
    %907 = vmatpush1.msra.mxu0 0.0
    %908 = vmatprep.subr.mxu0 0.0
    %909 = vmatpush1.msra.mxu0 0.0
    %910 = vmatprep.subr.mxu0 0.0
    %911 = vmatpush1.msra.mxu0 0.0
    %912 = vmatprep.subr.mxu0 0.0
    %913 = vmatpush1.msra.mxu0 0.0
    %914 = vmatprep.subr.mxu0 0.0
    %915 = vmatpush1.msra.mxu0 0.0
    %916 = vmatprep.subr.mxu0 0.0
    %917 = vmatpush1.msra.mxu0 0.0
    %918 = vmatprep.subr.mxu0 0.0
    %919 = vmatpush1.msra.mxu0 0.0
    %920 = vmatprep.subr.mxu0 0.0
    %921 = vmatpush1.msra.mxu0 0.0
    %922 = vmatprep.subr.mxu0 0.0
    %923 = vmatpush1.msra.mxu0 0.0
    %924 = vmatprep.subr.mxu0 0.0
    %925 = vmatpush1.msra.mxu0 0.0
    %v926 = vand.u32 %v28, 4294901760
    %v927 = vsub.f32 %v28, %v926
    %v928 = vand.u32 %v927, 4294901760
    %929 = vmatprep.subr.mxu0 %v928
    %v930 = vand.u32 %v27, 4294901760
    %v931 = vsub.f32 %v27, %v930
    %v932 = vand.u32 %v931, 4294901760
    %933 = vmatpush1.msra.mxu0 %v932
    %v934 = vand.u32 %v26, 4294901760
    %v935 = vsub.f32 %v26, %v934
    %v936 = vand.u32 %v935, 4294901760
    %937 = vmatprep.subr.mxu0 %v936
    %v938 = vand.u32 %v25, 4294901760
    %v939 = vsub.f32 %v25, %v938
    %v940 = vand.u32 %v939, 4294901760
    %941 = vmatpush1.msra.mxu0 %v940
    %v942 = vand.u32 %v24, 4294901760
    %v943 = vsub.f32 %v24, %v942
    %v944 = vand.u32 %v943, 4294901760
    %945 = vmatprep.subr.mxu0 %v944
    %v946 = vand.u32 %v23, 4294901760
    %v947 = vsub.f32 %v23, %v946
    %v948 = vand.u32 %v947, 4294901760
    %949 = vmatpush1.msra.mxu0 %v948
    %v950 = vand.u32 %v22, 4294901760
    %v951 = vsub.f32 %v22, %v950
    %v952 = vand.u32 %v951, 4294901760
    %953 = vmatprep.subr.mxu0 %v952
    %v954 = vand.u32 %v21, 4294901760
    %v955 = vsub.f32 %v21, %v954
    %v956 = vand.u32 %v955, 4294901760
    %957 = vmatpush1.msra.mxu0 %v956
    %958 = vmatprep.subr.mxu0 0.0
    %959 = vmatpush2.msra.mxu0 0.0
    %960 = vmatprep.subr.mxu0 0.0
    %961 = vmatpush2.msra.mxu0 0.0
    %962 = vmatprep.subr.mxu0 0.0
    %963 = vmatpush2.msra.mxu0 0.0
    %964 = vmatprep.subr.mxu0 0.0
    %965 = vmatpush2.msra.mxu0 0.0
    %966 = vmatprep.subr.mxu0 0.0
    %967 = vmatpush2.msra.mxu0 0.0
    %968 = vmatprep.subr.mxu0 0.0
    %969 = vmatpush2.msra.mxu0 0.0
    %970 = vmatprep.subr.mxu0 0.0
    %971 = vmatpush2.msra.mxu0 0.0
    %972 = vmatprep.subr.mxu0 0.0
    %973 = vmatpush2.msra.mxu0 0.0
    %974 = vmatprep.subr.mxu0 0.0
    %975 = vmatpush2.msra.mxu0 0.0
    %976 = vmatprep.subr.mxu0 0.0
    %977 = vmatpush2.msra.mxu0 0.0
    %978 = vmatprep.subr.mxu0 0.0
    %979 = vmatpush2.msra.mxu0 0.0
    %980 = vmatprep.subr.mxu0 0.0
    %981 = vmatpush2.msra.mxu0 0.0
    %982 = vmatprep.subr.mxu0 0.0
    %983 = vmatpush2.msra.mxu0 0.0
    %984 = vmatprep.subr.mxu0 0.0
    %985 = vmatpush2.msra.mxu0 0.0
    %986 = vmatprep.subr.mxu0 0.0
    %987 = vmatpush2.msra.mxu0 0.0
    %988 = vmatprep.subr.mxu0 0.0
    %989 = vmatpush2.msra.mxu0 0.0
    %990 = vmatprep.mubr.f32.mxu0 0.0
    %v991 = vand.u32 %v115, 4294901760
    %992 = vmatmul.mubr.f32.gmra.mxu0 %v991
    %v993 = vpop.f32.mrf.mxu0
    %v994 = vadd.f32 %v799, %v993
    %v995 = vpop.f32.mrf.mxu0
    %v996 = vadd.f32 %v801, %v995
    %997 = vmatprep.mubr.f32.mxu0 0.0
    %v998 = vand.u32 %v118, 4294901760
    %999 = vmatmul.mubr.f32.gmra.mxu0 %v998
    %v1000 = vpop.f32.mrf.mxu0
    %v1001 = vadd.f32 %v808, %v1000
    %v1002 = vpop.f32.mrf.mxu0
    %v1003 = vadd.f32 %v810, %v1002
    %1004 = vmatprep.mubr.f32.mxu0 0.0
    %v1005 = vand.u32 %v121, 4294901760
    %1006 = vmatmul.mubr.f32.gmra.mxu0 %v1005
    %v1007 = vpop.f32.mrf.mxu0
    %v1008 = vadd.f32 %v817, %v1007
    %v1009 = vpop.f32.mrf.mxu0
    %v1010 = vadd.f32 %v819, %v1009
    %1011 = vmatprep.mubr.f32.mxu0 0.0
    %v1012 = vand.u32 %v124, 4294901760
    %1013 = vmatmul.mubr.f32.gmra.mxu0 %v1012
    %v1014 = vpop.f32.mrf.mxu0
    %v1015 = vadd.f32 %v826, %v1014
    %v1016 = vpop.f32.mrf.mxu0
    %v1017 = vadd.f32 %v828, %v1016
    %1018 = vmatprep.mubr.f32.mxu0 0.0
    %v1019 = vand.u32 %v127, 4294901760
    %1020 = vmatmul.mubr.f32.gmra.mxu0 %v1019
    %v1021 = vpop.f32.mrf.mxu0
    %v1022 = vadd.f32 %v835, %v1021
    %v1023 = vpop.f32.mrf.mxu0
    %v1024 = vadd.f32 %v837, %v1023
    %1025 = vmatprep.mubr.f32.mxu0 0.0
    %v1026 = vand.u32 %v130, 4294901760
    %1027 = vmatmul.mubr.f32.gmra.mxu0 %v1026
    %v1028 = vpop.f32.mrf.mxu0
    %v1029 = vadd.f32 %v844, %v1028
    %v1030 = vpop.f32.mrf.mxu0
    %v1031 = vadd.f32 %v846, %v1030
    %1032 = vmatprep.mubr.f32.mxu0 0.0
    %v1033 = vand.u32 %v133, 4294901760
    %1034 = vmatmul.mubr.f32.gmra.mxu0 %v1033
    %v1035 = vpop.f32.mrf.mxu0
    %v1036 = vadd.f32 %v853, %v1035
    %v1037 = vpop.f32.mrf.mxu0
    %v1038 = vadd.f32 %v855, %v1037
    %1039 = vmatprep.mubr.f32.mxu0 0.0
    %v1040 = vand.u32 %v136, 4294901760
    %1041 = vmatmul.mubr.f32.gmra.mxu0 %v1040
    %v1042 = vpop.f32.mrf.mxu0
    %v1043 = vadd.f32 %v862, %v1042
    %v1044 = vpop.f32.mrf.mxu0
    %v1045 = vadd.f32 %v864, %v1044
    %1046 = vmatprep.mubr.f32.mxu0 0.0
    %v1047 = vand.u32 %v139, 4294901760
    %1048 = vmatmul.mubr.f32.gmra.mxu0 %v1047
    %v1049 = vpop.f32.mrf.mxu0
    %v1050 = vadd.f32 %v871, %v1049
    %v1051 = vpop.f32.mrf.mxu0
    %v1052 = vadd.f32 %v873, %v1051
    %1053 = vmatprep.mubr.f32.mxu0 0.0
    %v1054 = vand.u32 %v142, 4294901760
    %1055 = vmatmul.mubr.f32.gmra.mxu0 %v1054
    %v1056 = vpop.f32.mrf.mxu0
    %v1057 = vadd.f32 %v880, %v1056
    %v1058 = vpop.f32.mrf.mxu0
    %v1059 = vadd.f32 %v882, %v1058
    %1060 = vmatprep.mubr.f32.mxu0 0.0
    %v1061 = vand.u32 %v145, 4294901760
    %1062 = vmatmul.mubr.f32.gmra.mxu0 %v1061
    %v1063 = vpop.f32.mrf.mxu0
    %v1064 = vadd.f32 %v889, %v1063
    %v1065 = vpop.f32.mrf.mxu0
    %v1066 = vadd.f32 %v891, %v1065
    %1067 = vmatprep.mubr.f32.mxu0 0.0
    %v1068 = vand.u32 %v148, 4294901760
    %1069 = vmatmul.mubr.f32.gmra.mxu0 %v1068
    %v1070 = vpop.f32.mrf.mxu0
    %v1071 = vadd.f32 %v898, %v1070
    %v1072 = vpop.f32.mrf.mxu0
    %v1073 = vadd.f32 %v900, %v1072
    %1074 = vdwg.mxu0
    %1075 = vmatprep.subr.mxu0 0.0
    %1076 = vmatpush1.msra.mxu0 0.0
    %1077 = vmatprep.subr.mxu0 0.0
    %1078 = vmatpush1.msra.mxu0 0.0
    %1079 = vmatprep.subr.mxu0 0.0
    %1080 = vmatpush1.msra.mxu0 0.0
    %1081 = vmatprep.subr.mxu0 0.0
    %1082 = vmatpush1.msra.mxu0 0.0
    %1083 = vmatprep.subr.mxu0 0.0
    %1084 = vmatpush1.msra.mxu0 0.0
    %1085 = vmatprep.subr.mxu0 0.0
    %1086 = vmatpush1.msra.mxu0 0.0
    %1087 = vmatprep.subr.mxu0 0.0
    %1088 = vmatpush1.msra.mxu0 0.0
    %1089 = vmatprep.subr.mxu0 0.0
    %1090 = vmatpush1.msra.mxu0 0.0
    %1091 = vmatprep.subr.mxu0 0.0
    %1092 = vmatpush1.msra.mxu0 0.0
    %1093 = vmatprep.subr.mxu0 0.0
    %1094 = vmatpush1.msra.mxu0 0.0
    %1095 = vmatprep.subr.mxu0 0.0
    %1096 = vmatpush1.msra.mxu0 0.0
    %1097 = vmatprep.subr.mxu0 0.0
    %1098 = vmatpush1.msra.mxu0 0.0
    %v1099 = vand.u32 %v28, 4294901760
    %1100 = vmatprep.subr.mxu0 %v1099
    %v1101 = vand.u32 %v27, 4294901760
    %1102 = vmatpush1.msra.mxu0 %v1101
    %v1103 = vand.u32 %v26, 4294901760
    %1104 = vmatprep.subr.mxu0 %v1103
    %v1105 = vand.u32 %v25, 4294901760
    %1106 = vmatpush1.msra.mxu0 %v1105
    %v1107 = vand.u32 %v24, 4294901760
    %1108 = vmatprep.subr.mxu0 %v1107
    %v1109 = vand.u32 %v23, 4294901760
    %1110 = vmatpush1.msra.mxu0 %v1109
    %v1111 = vand.u32 %v22, 4294901760
    %1112 = vmatprep.subr.mxu0 %v1111
    %v1113 = vand.u32 %v21, 4294901760
    %1114 = vmatpush1.msra.mxu0 %v1113
    %1115 = vmatprep.subr.mxu0 0.0
    %1116 = vmatpush2.msra.mxu0 0.0
    %1117 = vmatprep.subr.mxu0 0.0
    %1118 = vmatpush2.msra.mxu0 0.0
    %1119 = vmatprep.subr.mxu0 0.0
    %1120 = vmatpush2.msra.mxu0 0.0
    %1121 = vmatprep.subr.mxu0 0.0
    %1122 = vmatpush2.msra.mxu0 0.0
    %1123 = vmatprep.subr.mxu0 0.0
    %1124 = vmatpush2.msra.mxu0 0.0
    %1125 = vmatprep.subr.mxu0 0.0
    %1126 = vmatpush2.msra.mxu0 0.0
    %1127 = vmatprep.subr.mxu0 0.0
    %1128 = vmatpush2.msra.mxu0 0.0
    %1129 = vmatprep.subr.mxu0 0.0
    %1130 = vmatpush2.msra.mxu0 0.0
    %1131 = vmatprep.subr.mxu0 0.0
    %1132 = vmatpush2.msra.mxu0 0.0
    %1133 = vmatprep.subr.mxu0 0.0
    %1134 = vmatpush2.msra.mxu0 0.0
    %1135 = vmatprep.subr.mxu0 0.0
    %1136 = vmatpush2.msra.mxu0 0.0
    %1137 = vmatprep.subr.mxu0 0.0
    %1138 = vmatpush2.msra.mxu0 0.0
    %1139 = vmatprep.subr.mxu0 0.0
    %1140 = vmatpush2.msra.mxu0 0.0
    %1141 = vmatprep.subr.mxu0 0.0
    %1142 = vmatpush2.msra.mxu0 0.0
    %1143 = vmatprep.subr.mxu0 0.0
    %1144 = vmatpush2.msra.mxu0 0.0
    %1145 = vmatprep.subr.mxu0 0.0
    %1146 = vmatpush2.msra.mxu0 0.0
    %1147 = vmatprep.mubr.f32.mxu0 0.0
    %v1148 = vand.u32 %v115, 4294901760
    %1149 = vmatmul.mubr.f32.gmra.mxu0 %v1148
    %v1150 = vpop.f32.mrf.mxu0
    %v1151 = vadd.f32 %v994, %v1150
    %v1152 = vpop.f32.mrf.mxu0
    %v1153 = vadd.f32 %v996, %v1152
    %1154 = vmatprep.mubr.f32.mxu0 0.0
    %v1155 = vand.u32 %v118, 4294901760
    %1156 = vmatmul.mubr.f32.gmra.mxu0 %v1155
    %v1157 = vpop.f32.mrf.mxu0
    %v1158 = vadd.f32 %v1001, %v1157
    %v1159 = vpop.f32.mrf.mxu0
    %v1160 = vadd.f32 %v1003, %v1159
    %1161 = vmatprep.mubr.f32.mxu0 0.0
    %v1162 = vand.u32 %v121, 4294901760
    %1163 = vmatmul.mubr.f32.gmra.mxu0 %v1162
    %v1164 = vpop.f32.mrf.mxu0
    %v1165 = vadd.f32 %v1008, %v1164
    %v1166 = vpop.f32.mrf.mxu0
    %v1167 = vadd.f32 %v1010, %v1166
    %1168 = vmatprep.mubr.f32.mxu0 0.0
    %v1169 = vand.u32 %v124, 4294901760
    %1170 = vmatmul.mubr.f32.gmra.mxu0 %v1169
    %v1171 = vpop.f32.mrf.mxu0
    %v1172 = vadd.f32 %v1015, %v1171
    %v1173 = vpop.f32.mrf.mxu0
    %v1174 = vadd.f32 %v1017, %v1173
    %1175 = vmatprep.mubr.f32.mxu0 0.0
    %v1176 = vand.u32 %v127, 4294901760
    %1177 = vmatmul.mubr.f32.gmra.mxu0 %v1176
    %v1178 = vpop.f32.mrf.mxu0
    %v1179 = vadd.f32 %v1022, %v1178
    %v1180 = vpop.f32.mrf.mxu0
    %v1181 = vadd.f32 %v1024, %v1180
    %1182 = vmatprep.mubr.f32.mxu0 0.0
    %v1183 = vand.u32 %v130, 4294901760
    %1184 = vmatmul.mubr.f32.gmra.mxu0 %v1183
    %v1185 = vpop.f32.mrf.mxu0
    %v1186 = vadd.f32 %v1029, %v1185
    %v1187 = vpop.f32.mrf.mxu0
    %v1188 = vadd.f32 %v1031, %v1187
    %1189 = vmatprep.mubr.f32.mxu0 0.0
    %v1190 = vand.u32 %v133, 4294901760
    %1191 = vmatmul.mubr.f32.gmra.mxu0 %v1190
    %v1192 = vpop.f32.mrf.mxu0
    %v1193 = vadd.f32 %v1036, %v1192
    %v1194 = vpop.f32.mrf.mxu0
    %v1195 = vadd.f32 %v1038, %v1194
    %1196 = vmatprep.mubr.f32.mxu0 0.0
    %v1197 = vand.u32 %v136, 4294901760
    %1198 = vmatmul.mubr.f32.gmra.mxu0 %v1197
    %v1199 = vpop.f32.mrf.mxu0
    %v1200 = vadd.f32 %v1043, %v1199
    %v1201 = vpop.f32.mrf.mxu0
    %v1202 = vadd.f32 %v1045, %v1201
    %1203 = vmatprep.mubr.f32.mxu0 0.0
    %v1204 = vand.u32 %v139, 4294901760
    %1205 = vmatmul.mubr.f32.gmra.mxu0 %v1204
    %v1206 = vpop.f32.mrf.mxu0
    %v1207 = vadd.f32 %v1050, %v1206
    %v1208 = vpop.f32.mrf.mxu0
    %v1209 = vadd.f32 %v1052, %v1208
    %1210 = vmatprep.mubr.f32.mxu0 0.0
    %v1211 = vand.u32 %v142, 4294901760
    %1212 = vmatmul.mubr.f32.gmra.mxu0 %v1211
    %v1213 = vpop.f32.mrf.mxu0
    %v1214 = vadd.f32 %v1057, %v1213
    %v1215 = vpop.f32.mrf.mxu0
    %v1216 = vadd.f32 %v1059, %v1215
    %1217 = vmatprep.mubr.f32.mxu0 0.0
    %v1218 = vand.u32 %v145, 4294901760
    %1219 = vmatmul.mubr.f32.gmra.mxu0 %v1218
    %v1220 = vpop.f32.mrf.mxu0
    %v1221 = vadd.f32 %v1064, %v1220
    %v1222 = vpop.f32.mrf.mxu0
    %v1223 = vadd.f32 %v1066, %v1222
    %1224 = vmatprep.mubr.f32.mxu0 0.0
    %v1225 = vand.u32 %v148, 4294901760
    %1226 = vmatmul.mubr.f32.gmra.mxu0 %v1225
    %v1227 = vpop.f32.mrf.mxu0
    %v1228 = vadd.f32 %v1071, %v1227
    %v1229 = vpop.f32.mrf.mxu0
    %v1230 = vadd.f32 %v1073, %v1229
    %1231 = vdwg.mxu0
    %1232 = vset.pattern.permute.xlu0 1
    %1233 = vperm.xlu0 %1232, %v41
    %v1234 = vpop.permute.xlu0 %1233
    %1236 = vset.pattern.permute.xlu0 1
    %1237 = vperm.xlu0 %1236, %v42
    %v1238 = vpop.permute.xlu0 %1237
    %1240 = vset.pattern.permute.xlu0 1
    %1241 = vperm.xlu0 %1240, %v43
    %v1242 = vpop.permute.xlu0 %1241
    %1244 = vset.pattern.permute.xlu0 1
    %1245 = vperm.xlu0 %1244, %v44
    %v1246 = vpop.permute.xlu0 %1245
    %1248 = vset.pattern.permute.xlu0 1
    %1249 = vperm.xlu0 %1248, %v45
    %v1250 = vpop.permute.xlu0 %1249
    %1252 = vset.pattern.permute.xlu0 1
    %1253 = vperm.xlu0 %1252, %v46
    %v1254 = vpop.permute.xlu0 %1253
    %1256 = vset.pattern.permute.xlu0 1
    %1257 = vperm.xlu0 %1256, %v47
    %v1258 = vpop.permute.xlu0 %1257
    %1260 = vset.pattern.permute.xlu0 1
    %1261 = vperm.xlu0 %1260, %v48
    %v1262 = vpop.permute.xlu0 %1261
    %1264 = vset.pattern.permute.xlu0 1
    %1265 = vperm.xlu0 %1264, %v49
    %v1266 = vpop.permute.xlu0 %1265
    %1268 = vset.pattern.permute.xlu0 1
    %1269 = vperm.xlu0 %1268, %v50
    %v1270 = vpop.permute.xlu0 %1269
    %1272 = vset.pattern.permute.xlu0 1
    %1273 = vperm.xlu0 %1272, %v51
    %v1274 = vpop.permute.xlu0 %1273
    %1276 = vset.pattern.permute.xlu0 1
    %1277 = vperm.xlu0 %1276, %v52
    %v1278 = vpop.permute.xlu0 %1277
    %v1280 = vmax.f32 %v1151, %v1234
    %v1281 = vmax.f32 %v1153, %v1234
    %v1282 = vmax.f32 %v1158, %v1238
    %v1283 = vmax.f32 %v1160, %v1238
    %v1284 = vmax.f32 %v1165, %v1242
    %v1285 = vmax.f32 %v1167, %v1242
    %v1286 = vmax.f32 %v1172, %v1246
    %v1287 = vmax.f32 %v1174, %v1246
    %v1288 = vmax.f32 %v1179, %v1250
    %v1289 = vmax.f32 %v1181, %v1250
    %v1290 = vmax.f32 %v1186, %v1254
    %v1291 = vmax.f32 %v1188, %v1254
    %v1292 = vmax.f32 %v1193, %v1258
    %v1293 = vmax.f32 %v1195, %v1258
    %v1294 = vmax.f32 %v1200, %v1262
    %v1295 = vmax.f32 %v1202, %v1262
    %v1296 = vmax.f32 %v1207, %v1266
    %v1297 = vmax.f32 %v1209, %v1266
    %v1298 = vmax.f32 %v1214, %v1270
    %v1299 = vmax.f32 %v1216, %v1270
    %v1300 = vmax.f32 %v1221, %v1274
    %v1301 = vmax.f32 %v1223, %v1274
    %v1302 = vmax.f32 %v1228, %v1278
    %v1303 = vmax.f32 %v1230, %v1278
    %v1304 = vld [vmem:[%s3] sm:$0xff]
    %v1305 = vld [vmem:[%s3 + $0x8] sm:$0xff]
    %v1306 = vld [vmem:[%s4] sm:$0xff]
    %v1307 = vld [vmem:[%s4 + $0x8] sm:$0xff]
    %1309 = vset.pattern.permute.xlu0 0
    %1310 = vperm.xlu0 %1309, %v1306
    %v1311 = vpop.permute.xlu0 %1310
    %1314 = vset.pattern.permute.xlu0 0
    %1315 = vperm.xlu0 %1314, %v1307
    %v1316 = vpop.permute.xlu0 %1315
    %vm1318 = vcmask 785408
    %v1320 = vsel %vm1318, %v1304, 0
    %v1323 = vsel %vm1318, %v1305, 0
    %1325 = vmatprep.subr.mxu0 0.0
    %1326 = vmatpush1.msra.mxu0 0.0
    %1327 = vmatprep.subr.mxu0 0.0
    %1328 = vmatpush1.msra.mxu0 0.0
    %1329 = vmatprep.subr.mxu0 0.0
    %1330 = vmatpush1.msra.mxu0 0.0
    %1331 = vmatprep.subr.mxu0 0.0
    %1332 = vmatpush1.msra.mxu0 0.0
    %v1333 = vand.u32 %v1303, 4294901760
    %1334 = vmatprep.subr.mxu0 %v1333
    %v1335 = vand.u32 %v1302, 4294901760
    %1336 = vmatpush1.msra.mxu0 %v1335
    %v1337 = vand.u32 %v1301, 4294901760
    %1338 = vmatprep.subr.mxu0 %v1337
    %v1339 = vand.u32 %v1300, 4294901760
    %1340 = vmatpush1.msra.mxu0 %v1339
    %v1341 = vand.u32 %v1299, 4294901760
    %1342 = vmatprep.subr.mxu0 %v1341
    %v1343 = vand.u32 %v1298, 4294901760
    %1344 = vmatpush1.msra.mxu0 %v1343
    %v1345 = vand.u32 %v1297, 4294901760
    %1346 = vmatprep.subr.mxu0 %v1345
    %v1347 = vand.u32 %v1296, 4294901760
    %1348 = vmatpush1.msra.mxu0 %v1347
    %v1349 = vand.u32 %v1295, 4294901760
    %1350 = vmatprep.subr.mxu0 %v1349
    %v1351 = vand.u32 %v1294, 4294901760
    %1352 = vmatpush1.msra.mxu0 %v1351
    %v1353 = vand.u32 %v1293, 4294901760
    %1354 = vmatprep.subr.mxu0 %v1353
    %v1355 = vand.u32 %v1292, 4294901760
    %1356 = vmatpush1.msra.mxu0 %v1355
    %v1357 = vand.u32 %v1291, 4294901760
    %1358 = vmatprep.subr.mxu0 %v1357
    %v1359 = vand.u32 %v1290, 4294901760
    %1360 = vmatpush1.msra.mxu0 %v1359
    %v1361 = vand.u32 %v1289, 4294901760
    %1362 = vmatprep.subr.mxu0 %v1361
    %v1363 = vand.u32 %v1288, 4294901760
    %1364 = vmatpush1.msra.mxu0 %v1363
    %v1365 = vand.u32 %v1287, 4294901760
    %1366 = vmatprep.subr.mxu0 %v1365
    %v1367 = vand.u32 %v1286, 4294901760
    %1368 = vmatpush1.msra.mxu0 %v1367
    %v1369 = vand.u32 %v1285, 4294901760
    %1370 = vmatprep.subr.mxu0 %v1369
    %v1371 = vand.u32 %v1284, 4294901760
    %1372 = vmatpush1.msra.mxu0 %v1371
    %v1373 = vand.u32 %v1283, 4294901760
    %1374 = vmatprep.subr.mxu0 %v1373
    %v1375 = vand.u32 %v1282, 4294901760
    %1376 = vmatpush1.msra.mxu0 %v1375
    %v1377 = vand.u32 %v1281, 4294901760
    %1378 = vmatprep.subr.mxu0 %v1377
    %v1379 = vand.u32 %v1280, 4294901760
    %1380 = vmatpush1.msra.mxu0 %v1379
    %1381 = vmatprep.subr.mxu0 0.0
    %1382 = vmatpush2.msra.mxu0 0.0
    %1383 = vmatprep.subr.mxu0 0.0
    %1384 = vmatpush2.msra.mxu0 0.0
    %1385 = vmatprep.subr.mxu0 0.0
    %1386 = vmatpush2.msra.mxu0 0.0
    %1387 = vmatprep.subr.mxu0 0.0
    %1388 = vmatpush2.msra.mxu0 0.0
    %1389 = vmatprep.subr.mxu0 0.0
    %1390 = vmatpush2.msra.mxu0 0.0
    %1391 = vmatprep.subr.mxu0 0.0
    %1392 = vmatpush2.msra.mxu0 0.0
    %1393 = vmatprep.subr.mxu0 0.0
    %1394 = vmatpush2.msra.mxu0 0.0
    %1395 = vmatprep.subr.mxu0 0.0
    %1396 = vmatpush2.msra.mxu0 0.0
    %1397 = vmatprep.subr.mxu0 0.0
    %1398 = vmatpush2.msra.mxu0 0.0
    %1399 = vmatprep.subr.mxu0 0.0
    %1400 = vmatpush2.msra.mxu0 0.0
    %1401 = vmatprep.subr.mxu0 0.0
    %1402 = vmatpush2.msra.mxu0 0.0
    %1403 = vmatprep.subr.mxu0 0.0
    %1404 = vmatpush2.msra.mxu0 0.0
    %1405 = vmatprep.subr.mxu0 0.0
    %1406 = vmatpush2.msra.mxu0 0.0
    %1407 = vmatprep.subr.mxu0 0.0
    %1408 = vmatpush2.msra.mxu0 0.0
    %1409 = vmatprep.subr.mxu0 0.0
    %1410 = vmatpush2.msra.mxu0 0.0
    %1411 = vmatprep.subr.mxu0 0.0
    %1412 = vmatpush2.msra.mxu0 0.0
    %1413 = vmatprep.mubr.f32.mxu0 0.0
    %v1414 = vand.u32 %v1320, 4294901760
    %v1415 = vsub.f32 %v1320, %v1414
    %v1416 = vand.u32 %v1415, 4294901760
    %v1417 = vsub.f32 %v1415, %v1416
    %v1418 = vand.u32 %v1417, 4294901760
    %1419 = vmatmul.mubr.f32.gmra.mxu0 %v1418
    %v1420 = vpop.f32.mrf.mxu0
    %v1421 = vadd.f32 %v1311, %v1420
    %v1422 = vpop.f32.mrf.mxu0
    %v1423 = vadd.f32 %v1311, %v1422
    %1424 = vmatprep.mubr.f32.mxu0 0.0
    %v1425 = vand.u32 %v1323, 4294901760
    %v1426 = vsub.f32 %v1323, %v1425
    %v1427 = vand.u32 %v1426, 4294901760
    %v1428 = vsub.f32 %v1426, %v1427
    %v1429 = vand.u32 %v1428, 4294901760
    %1430 = vmatmul.mubr.f32.gmra.mxu0 %v1429
    %v1431 = vpop.f32.mrf.mxu0
    %v1432 = vadd.f32 %v1316, %v1431
    %v1433 = vpop.f32.mrf.mxu0
    %v1434 = vadd.f32 %v1316, %v1433
    %1435 = vdwg.mxu0
    %1436 = vmatprep.subr.mxu0 0.0
    %1437 = vmatpush1.msra.mxu0 0.0
    %1438 = vmatprep.subr.mxu0 0.0
    %1439 = vmatpush1.msra.mxu0 0.0
    %1440 = vmatprep.subr.mxu0 0.0
    %1441 = vmatpush1.msra.mxu0 0.0
    %1442 = vmatprep.subr.mxu0 0.0
    %1443 = vmatpush1.msra.mxu0 0.0
    %v1444 = vand.u32 %v1303, 4294901760
    %v1445 = vsub.f32 %v1303, %v1444
    %v1446 = vand.u32 %v1445, 4294901760
    %v1447 = vsub.f32 %v1445, %v1446
    %v1448 = vand.u32 %v1447, 4294901760
    %1449 = vmatprep.subr.mxu0 %v1448
    %v1450 = vand.u32 %v1302, 4294901760
    %v1451 = vsub.f32 %v1302, %v1450
    %v1452 = vand.u32 %v1451, 4294901760
    %v1453 = vsub.f32 %v1451, %v1452
    %v1454 = vand.u32 %v1453, 4294901760
    %1455 = vmatpush1.msra.mxu0 %v1454
    %v1456 = vand.u32 %v1301, 4294901760
    %v1457 = vsub.f32 %v1301, %v1456
    %v1458 = vand.u32 %v1457, 4294901760
    %v1459 = vsub.f32 %v1457, %v1458
    %v1460 = vand.u32 %v1459, 4294901760
    %1461 = vmatprep.subr.mxu0 %v1460
    %v1462 = vand.u32 %v1300, 4294901760
    %v1463 = vsub.f32 %v1300, %v1462
    %v1464 = vand.u32 %v1463, 4294901760
    %v1465 = vsub.f32 %v1463, %v1464
    %v1466 = vand.u32 %v1465, 4294901760
    %1467 = vmatpush1.msra.mxu0 %v1466
    %v1468 = vand.u32 %v1299, 4294901760
    %v1469 = vsub.f32 %v1299, %v1468
    %v1470 = vand.u32 %v1469, 4294901760
    %v1471 = vsub.f32 %v1469, %v1470
    %v1472 = vand.u32 %v1471, 4294901760
    %1473 = vmatprep.subr.mxu0 %v1472
    %v1474 = vand.u32 %v1298, 4294901760
    %v1475 = vsub.f32 %v1298, %v1474
    %v1476 = vand.u32 %v1475, 4294901760
    %v1477 = vsub.f32 %v1475, %v1476
    %v1478 = vand.u32 %v1477, 4294901760
    %1479 = vmatpush1.msra.mxu0 %v1478
    %v1480 = vand.u32 %v1297, 4294901760
    %v1481 = vsub.f32 %v1297, %v1480
    %v1482 = vand.u32 %v1481, 4294901760
    %v1483 = vsub.f32 %v1481, %v1482
    %v1484 = vand.u32 %v1483, 4294901760
    %1485 = vmatprep.subr.mxu0 %v1484
    %v1486 = vand.u32 %v1296, 4294901760
    %v1487 = vsub.f32 %v1296, %v1486
    %v1488 = vand.u32 %v1487, 4294901760
    %v1489 = vsub.f32 %v1487, %v1488
    %v1490 = vand.u32 %v1489, 4294901760
    %1491 = vmatpush1.msra.mxu0 %v1490
    %v1492 = vand.u32 %v1295, 4294901760
    %v1493 = vsub.f32 %v1295, %v1492
    %v1494 = vand.u32 %v1493, 4294901760
    %v1495 = vsub.f32 %v1493, %v1494
    %v1496 = vand.u32 %v1495, 4294901760
    %1497 = vmatprep.subr.mxu0 %v1496
    %v1498 = vand.u32 %v1294, 4294901760
    %v1499 = vsub.f32 %v1294, %v1498
    %v1500 = vand.u32 %v1499, 4294901760
    %v1501 = vsub.f32 %v1499, %v1500
    %v1502 = vand.u32 %v1501, 4294901760
    %1503 = vmatpush1.msra.mxu0 %v1502
    %v1504 = vand.u32 %v1293, 4294901760
    %v1505 = vsub.f32 %v1293, %v1504
    %v1506 = vand.u32 %v1505, 4294901760
    %v1507 = vsub.f32 %v1505, %v1506
    %v1508 = vand.u32 %v1507, 4294901760
    %1509 = vmatprep.subr.mxu0 %v1508
    %v1510 = vand.u32 %v1292, 4294901760
    %v1511 = vsub.f32 %v1292, %v1510
    %v1512 = vand.u32 %v1511, 4294901760
    %v1513 = vsub.f32 %v1511, %v1512
    %v1514 = vand.u32 %v1513, 4294901760
    %1515 = vmatpush1.msra.mxu0 %v1514
    %v1516 = vand.u32 %v1291, 4294901760
    %v1517 = vsub.f32 %v1291, %v1516
    %v1518 = vand.u32 %v1517, 4294901760
    %v1519 = vsub.f32 %v1517, %v1518
    %v1520 = vand.u32 %v1519, 4294901760
    %1521 = vmatprep.subr.mxu0 %v1520
    %v1522 = vand.u32 %v1290, 4294901760
    %v1523 = vsub.f32 %v1290, %v1522
    %v1524 = vand.u32 %v1523, 4294901760
    %v1525 = vsub.f32 %v1523, %v1524
    %v1526 = vand.u32 %v1525, 4294901760
    %1527 = vmatpush1.msra.mxu0 %v1526
    %v1528 = vand.u32 %v1289, 4294901760
    %v1529 = vsub.f32 %v1289, %v1528
    %v1530 = vand.u32 %v1529, 4294901760
    %v1531 = vsub.f32 %v1529, %v1530
    %v1532 = vand.u32 %v1531, 4294901760
    %1533 = vmatprep.subr.mxu0 %v1532
    %v1534 = vand.u32 %v1288, 4294901760
    %v1535 = vsub.f32 %v1288, %v1534
    %v1536 = vand.u32 %v1535, 4294901760
    %v1537 = vsub.f32 %v1535, %v1536
    %v1538 = vand.u32 %v1537, 4294901760
    %1539 = vmatpush1.msra.mxu0 %v1538
    %v1540 = vand.u32 %v1287, 4294901760
    %v1541 = vsub.f32 %v1287, %v1540
    %v1542 = vand.u32 %v1541, 4294901760
    %v1543 = vsub.f32 %v1541, %v1542
    %v1544 = vand.u32 %v1543, 4294901760
    %1545 = vmatprep.subr.mxu0 %v1544
    %v1546 = vand.u32 %v1286, 4294901760
    %v1547 = vsub.f32 %v1286, %v1546
    %v1548 = vand.u32 %v1547, 4294901760
    %v1549 = vsub.f32 %v1547, %v1548
    %v1550 = vand.u32 %v1549, 4294901760
    %1551 = vmatpush1.msra.mxu0 %v1550
    %v1552 = vand.u32 %v1285, 4294901760
    %v1553 = vsub.f32 %v1285, %v1552
    %v1554 = vand.u32 %v1553, 4294901760
    %v1555 = vsub.f32 %v1553, %v1554
    %v1556 = vand.u32 %v1555, 4294901760
    %1557 = vmatprep.subr.mxu0 %v1556
    %v1558 = vand.u32 %v1284, 4294901760
    %v1559 = vsub.f32 %v1284, %v1558
    %v1560 = vand.u32 %v1559, 4294901760
    %v1561 = vsub.f32 %v1559, %v1560
    %v1562 = vand.u32 %v1561, 4294901760
    %1563 = vmatpush1.msra.mxu0 %v1562
    %v1564 = vand.u32 %v1283, 4294901760
    %v1565 = vsub.f32 %v1283, %v1564
    %v1566 = vand.u32 %v1565, 4294901760
    %v1567 = vsub.f32 %v1565, %v1566
    %v1568 = vand.u32 %v1567, 4294901760
    %1569 = vmatprep.subr.mxu0 %v1568
    %v1570 = vand.u32 %v1282, 4294901760
    %v1571 = vsub.f32 %v1282, %v1570
    %v1572 = vand.u32 %v1571, 4294901760
    %v1573 = vsub.f32 %v1571, %v1572
    %v1574 = vand.u32 %v1573, 4294901760
    %1575 = vmatpush1.msra.mxu0 %v1574
    %v1576 = vand.u32 %v1281, 4294901760
    %v1577 = vsub.f32 %v1281, %v1576
    %v1578 = vand.u32 %v1577, 4294901760
    %v1579 = vsub.f32 %v1577, %v1578
    %v1580 = vand.u32 %v1579, 4294901760
    %1581 = vmatprep.subr.mxu0 %v1580
    %v1582 = vand.u32 %v1280, 4294901760
    %v1583 = vsub.f32 %v1280, %v1582
    %v1584 = vand.u32 %v1583, 4294901760
    %v1585 = vsub.f32 %v1583, %v1584
    %v1586 = vand.u32 %v1585, 4294901760
    %1587 = vmatpush1.msra.mxu0 %v1586
    %1588 = vmatprep.subr.mxu0 0.0
    %1589 = vmatpush2.msra.mxu0 0.0
    %1590 = vmatprep.subr.mxu0 0.0
    %1591 = vmatpush2.msra.mxu0 0.0
    %1592 = vmatprep.subr.mxu0 0.0
    %1593 = vmatpush2.msra.mxu0 0.0
    %1594 = vmatprep.subr.mxu0 0.0
    %1595 = vmatpush2.msra.mxu0 0.0
    %1596 = vmatprep.subr.mxu0 0.0
    %1597 = vmatpush2.msra.mxu0 0.0
    %1598 = vmatprep.subr.mxu0 0.0
    %1599 = vmatpush2.msra.mxu0 0.0
    %1600 = vmatprep.subr.mxu0 0.0
    %1601 = vmatpush2.msra.mxu0 0.0
    %1602 = vmatprep.subr.mxu0 0.0
    %1603 = vmatpush2.msra.mxu0 0.0
    %1604 = vmatprep.subr.mxu0 0.0
    %1605 = vmatpush2.msra.mxu0 0.0
    %1606 = vmatprep.subr.mxu0 0.0
    %1607 = vmatpush2.msra.mxu0 0.0
    %1608 = vmatprep.subr.mxu0 0.0
    %1609 = vmatpush2.msra.mxu0 0.0
    %1610 = vmatprep.subr.mxu0 0.0
    %1611 = vmatpush2.msra.mxu0 0.0
    %1612 = vmatprep.subr.mxu0 0.0
    %1613 = vmatpush2.msra.mxu0 0.0
    %1614 = vmatprep.subr.mxu0 0.0
    %1615 = vmatpush2.msra.mxu0 0.0
    %1616 = vmatprep.subr.mxu0 0.0
    %1617 = vmatpush2.msra.mxu0 0.0
    %1618 = vmatprep.subr.mxu0 0.0
    %1619 = vmatpush2.msra.mxu0 0.0
    %1620 = vmatprep.mubr.f32.mxu0 0.0
    %v1621 = vand.u32 %v1320, 4294901760
    %1622 = vmatmul.mubr.f32.gmra.mxu0 %v1621
    %v1623 = vpop.f32.mrf.mxu0
    %v1624 = vadd.f32 %v1421, %v1623
    %v1625 = vpop.f32.mrf.mxu0
    %v1626 = vadd.f32 %v1423, %v1625
    %1627 = vmatprep.mubr.f32.mxu0 0.0
    %v1628 = vand.u32 %v1323, 4294901760
    %1629 = vmatmul.mubr.f32.gmra.mxu0 %v1628
    %v1630 = vpop.f32.mrf.mxu0
    %v1631 = vadd.f32 %v1432, %v1630
    %v1632 = vpop.f32.mrf.mxu0
    %v1633 = vadd.f32 %v1434, %v1632
    %1634 = vdwg.mxu0
    %1635 = vmatprep.subr.mxu0 0.0
    %1636 = vmatpush1.msra.mxu0 0.0
    %1637 = vmatprep.subr.mxu0 0.0
    %1638 = vmatpush1.msra.mxu0 0.0
    %1639 = vmatprep.subr.mxu0 0.0
    %1640 = vmatpush1.msra.mxu0 0.0
    %1641 = vmatprep.subr.mxu0 0.0
    %1642 = vmatpush1.msra.mxu0 0.0
    %v1643 = vand.u32 %v1303, 4294901760
    %v1644 = vsub.f32 %v1303, %v1643
    %1645 = vmatprep.subr.mxu0 %v1644
    %v1646 = vand.u32 %v1302, 4294901760
    %v1647 = vsub.f32 %v1302, %v1646
    %1648 = vmatpush1.msra.mxu0 %v1647
    %v1649 = vand.u32 %v1301, 4294901760
    %v1650 = vsub.f32 %v1301, %v1649
    %1651 = vmatprep.subr.mxu0 %v1650
    %v1652 = vand.u32 %v1300, 4294901760
    %v1653 = vsub.f32 %v1300, %v1652
    %1654 = vmatpush1.msra.mxu0 %v1653
    %v1655 = vand.u32 %v1299, 4294901760
    %v1656 = vsub.f32 %v1299, %v1655
    %1657 = vmatprep.subr.mxu0 %v1656
    %v1658 = vand.u32 %v1298, 4294901760
    %v1659 = vsub.f32 %v1298, %v1658
    %1660 = vmatpush1.msra.mxu0 %v1659
    %v1661 = vand.u32 %v1297, 4294901760
    %v1662 = vsub.f32 %v1297, %v1661
    %1663 = vmatprep.subr.mxu0 %v1662
    %v1664 = vand.u32 %v1296, 4294901760
    %v1665 = vsub.f32 %v1296, %v1664
    %1666 = vmatpush1.msra.mxu0 %v1665
    %v1667 = vand.u32 %v1295, 4294901760
    %v1668 = vsub.f32 %v1295, %v1667
    %1669 = vmatprep.subr.mxu0 %v1668
    %v1670 = vand.u32 %v1294, 4294901760
    %v1671 = vsub.f32 %v1294, %v1670
    %1672 = vmatpush1.msra.mxu0 %v1671
    %v1673 = vand.u32 %v1293, 4294901760
    %v1674 = vsub.f32 %v1293, %v1673
    %1675 = vmatprep.subr.mxu0 %v1674
    %v1676 = vand.u32 %v1292, 4294901760
    %v1677 = vsub.f32 %v1292, %v1676
    %1678 = vmatpush1.msra.mxu0 %v1677
    %v1679 = vand.u32 %v1291, 4294901760
    %v1680 = vsub.f32 %v1291, %v1679
    %1681 = vmatprep.subr.mxu0 %v1680
    %v1682 = vand.u32 %v1290, 4294901760
    %v1683 = vsub.f32 %v1290, %v1682
    %1684 = vmatpush1.msra.mxu0 %v1683
    %v1685 = vand.u32 %v1289, 4294901760
    %v1686 = vsub.f32 %v1289, %v1685
    %1687 = vmatprep.subr.mxu0 %v1686
    %v1688 = vand.u32 %v1288, 4294901760
    %v1689 = vsub.f32 %v1288, %v1688
    %1690 = vmatpush1.msra.mxu0 %v1689
    %v1691 = vand.u32 %v1287, 4294901760
    %v1692 = vsub.f32 %v1287, %v1691
    %1693 = vmatprep.subr.mxu0 %v1692
    %v1694 = vand.u32 %v1286, 4294901760
    %v1695 = vsub.f32 %v1286, %v1694
    %1696 = vmatpush1.msra.mxu0 %v1695
    %v1697 = vand.u32 %v1285, 4294901760
    %v1698 = vsub.f32 %v1285, %v1697
    %1699 = vmatprep.subr.mxu0 %v1698
    %v1700 = vand.u32 %v1284, 4294901760
    %v1701 = vsub.f32 %v1284, %v1700
    %1702 = vmatpush1.msra.mxu0 %v1701
    %v1703 = vand.u32 %v1283, 4294901760
    %v1704 = vsub.f32 %v1283, %v1703
    %1705 = vmatprep.subr.mxu0 %v1704
    %v1706 = vand.u32 %v1282, 4294901760
    %v1707 = vsub.f32 %v1282, %v1706
    %1708 = vmatpush1.msra.mxu0 %v1707
    %v1709 = vand.u32 %v1281, 4294901760
    %v1710 = vsub.f32 %v1281, %v1709
    %1711 = vmatprep.subr.mxu0 %v1710
    %v1712 = vand.u32 %v1280, 4294901760
    %v1713 = vsub.f32 %v1280, %v1712
    %1714 = vmatpush1.msra.mxu0 %v1713
    %1715 = vmatprep.subr.mxu0 0.0
    %1716 = vmatpush2.msra.mxu0 0.0
    %1717 = vmatprep.subr.mxu0 0.0
    %1718 = vmatpush2.msra.mxu0 0.0
    %1719 = vmatprep.subr.mxu0 0.0
    %1720 = vmatpush2.msra.mxu0 0.0
    %1721 = vmatprep.subr.mxu0 0.0
    %1722 = vmatpush2.msra.mxu0 0.0
    %1723 = vmatprep.subr.mxu0 0.0
    %1724 = vmatpush2.msra.mxu0 0.0
    %1725 = vmatprep.subr.mxu0 0.0
    %1726 = vmatpush2.msra.mxu0 0.0
    %1727 = vmatprep.subr.mxu0 0.0
    %1728 = vmatpush2.msra.mxu0 0.0
    %1729 = vmatprep.subr.mxu0 0.0
    %1730 = vmatpush2.msra.mxu0 0.0
    %1731 = vmatprep.subr.mxu0 0.0
    %1732 = vmatpush2.msra.mxu0 0.0
    %1733 = vmatprep.subr.mxu0 0.0
    %1734 = vmatpush2.msra.mxu0 0.0
    %1735 = vmatprep.subr.mxu0 0.0
    %1736 = vmatpush2.msra.mxu0 0.0
    %1737 = vmatprep.subr.mxu0 0.0
    %1738 = vmatpush2.msra.mxu0 0.0
    %1739 = vmatprep.subr.mxu0 0.0
    %1740 = vmatpush2.msra.mxu0 0.0
    %1741 = vmatprep.subr.mxu0 0.0
    %1742 = vmatpush2.msra.mxu0 0.0
    %1743 = vmatprep.subr.mxu0 0.0
    %1744 = vmatpush2.msra.mxu0 0.0
    %1745 = vmatprep.subr.mxu0 0.0
    %1746 = vmatpush2.msra.mxu0 0.0
    %1747 = vmatprep.mubr.f32.mxu0 0.0
    %v1748 = vand.u32 %v1320, 4294901760
    %v1749 = vsub.f32 %v1320, %v1748
    %1750 = vmatmul.mubr.f32.gmra.mxu0 %v1749
    %v1751 = vpop.f32.mrf.mxu0
    %v1752 = vadd.f32 %v1624, %v1751
    %v1753 = vpop.f32.mrf.mxu0
    %v1754 = vadd.f32 %v1626, %v1753
    %1755 = vmatprep.mubr.f32.mxu0 0.0
    %v1756 = vand.u32 %v1323, 4294901760
    %v1757 = vsub.f32 %v1323, %v1756
    %1758 = vmatmul.mubr.f32.gmra.mxu0 %v1757
    %v1759 = vpop.f32.mrf.mxu0
    %v1760 = vadd.f32 %v1631, %v1759
    %v1761 = vpop.f32.mrf.mxu0
    %v1762 = vadd.f32 %v1633, %v1761
    %1763 = vdwg.mxu0
    %1764 = vmatprep.subr.mxu0 0.0
    %1765 = vmatpush1.msra.mxu0 0.0
    %1766 = vmatprep.subr.mxu0 0.0
    %1767 = vmatpush1.msra.mxu0 0.0
    %1768 = vmatprep.subr.mxu0 0.0
    %1769 = vmatpush1.msra.mxu0 0.0
    %1770 = vmatprep.subr.mxu0 0.0
    %1771 = vmatpush1.msra.mxu0 0.0
    %v1772 = vand.u32 %v1303, 4294901760
    %1773 = vmatprep.subr.mxu0 %v1772
    %v1774 = vand.u32 %v1302, 4294901760
    %1775 = vmatpush1.msra.mxu0 %v1774
    %v1776 = vand.u32 %v1301, 4294901760
    %1777 = vmatprep.subr.mxu0 %v1776
    %v1778 = vand.u32 %v1300, 4294901760
    %1779 = vmatpush1.msra.mxu0 %v1778
    %v1780 = vand.u32 %v1299, 4294901760
    %1781 = vmatprep.subr.mxu0 %v1780
    %v1782 = vand.u32 %v1298, 4294901760
    %1783 = vmatpush1.msra.mxu0 %v1782
    %v1784 = vand.u32 %v1297, 4294901760
    %1785 = vmatprep.subr.mxu0 %v1784
    %v1786 = vand.u32 %v1296, 4294901760
    %1787 = vmatpush1.msra.mxu0 %v1786
    %v1788 = vand.u32 %v1295, 4294901760
    %1789 = vmatprep.subr.mxu0 %v1788
    %v1790 = vand.u32 %v1294, 4294901760
    %1791 = vmatpush1.msra.mxu0 %v1790
    %v1792 = vand.u32 %v1293, 4294901760
    %1793 = vmatprep.subr.mxu0 %v1792
    %v1794 = vand.u32 %v1292, 4294901760
    %1795 = vmatpush1.msra.mxu0 %v1794
    %v1796 = vand.u32 %v1291, 4294901760
    %1797 = vmatprep.subr.mxu0 %v1796
    %v1798 = vand.u32 %v1290, 4294901760
    %1799 = vmatpush1.msra.mxu0 %v1798
    %v1800 = vand.u32 %v1289, 4294901760
    %1801 = vmatprep.subr.mxu0 %v1800
    %v1802 = vand.u32 %v1288, 4294901760
    %1803 = vmatpush1.msra.mxu0 %v1802
    %v1804 = vand.u32 %v1287, 4294901760
    %1805 = vmatprep.subr.mxu0 %v1804
    %v1806 = vand.u32 %v1286, 4294901760
    %1807 = vmatpush1.msra.mxu0 %v1806
    %v1808 = vand.u32 %v1285, 4294901760
    %1809 = vmatprep.subr.mxu0 %v1808
    %v1810 = vand.u32 %v1284, 4294901760
    %1811 = vmatpush1.msra.mxu0 %v1810
    %v1812 = vand.u32 %v1283, 4294901760
    %1813 = vmatprep.subr.mxu0 %v1812
    %v1814 = vand.u32 %v1282, 4294901760
    %1815 = vmatpush1.msra.mxu0 %v1814
    %v1816 = vand.u32 %v1281, 4294901760
    %1817 = vmatprep.subr.mxu0 %v1816
    %v1818 = vand.u32 %v1280, 4294901760
    %1819 = vmatpush1.msra.mxu0 %v1818
    %1820 = vmatprep.subr.mxu0 0.0
    %1821 = vmatpush2.msra.mxu0 0.0
    %1822 = vmatprep.subr.mxu0 0.0
    %1823 = vmatpush2.msra.mxu0 0.0
    %1824 = vmatprep.subr.mxu0 0.0
    %1825 = vmatpush2.msra.mxu0 0.0
    %1826 = vmatprep.subr.mxu0 0.0
    %1827 = vmatpush2.msra.mxu0 0.0
    %1828 = vmatprep.subr.mxu0 0.0
    %1829 = vmatpush2.msra.mxu0 0.0
    %1830 = vmatprep.subr.mxu0 0.0
    %1831 = vmatpush2.msra.mxu0 0.0
    %1832 = vmatprep.subr.mxu0 0.0
    %1833 = vmatpush2.msra.mxu0 0.0
    %1834 = vmatprep.subr.mxu0 0.0
    %1835 = vmatpush2.msra.mxu0 0.0
    %1836 = vmatprep.subr.mxu0 0.0
    %1837 = vmatpush2.msra.mxu0 0.0
    %1838 = vmatprep.subr.mxu0 0.0
    %1839 = vmatpush2.msra.mxu0 0.0
    %1840 = vmatprep.subr.mxu0 0.0
    %1841 = vmatpush2.msra.mxu0 0.0
    %1842 = vmatprep.subr.mxu0 0.0
    %1843 = vmatpush2.msra.mxu0 0.0
    %1844 = vmatprep.subr.mxu0 0.0
    %1845 = vmatpush2.msra.mxu0 0.0
    %1846 = vmatprep.subr.mxu0 0.0
    %1847 = vmatpush2.msra.mxu0 0.0
    %1848 = vmatprep.subr.mxu0 0.0
    %1849 = vmatpush2.msra.mxu0 0.0
    %1850 = vmatprep.subr.mxu0 0.0
    %1851 = vmatpush2.msra.mxu0 0.0
    %1852 = vmatprep.mubr.f32.mxu0 0.0
    %v1853 = vand.u32 %v1320, 4294901760
    %v1854 = vsub.f32 %v1320, %v1853
    %v1855 = vand.u32 %v1854, 4294901760
    %1856 = vmatmul.mubr.f32.gmra.mxu0 %v1855
    %v1857 = vpop.f32.mrf.mxu0
    %v1858 = vadd.f32 %v1752, %v1857
    %v1859 = vpop.f32.mrf.mxu0
    %v1860 = vadd.f32 %v1754, %v1859
    %1861 = vmatprep.mubr.f32.mxu0 0.0
    %v1862 = vand.u32 %v1323, 4294901760
    %v1863 = vsub.f32 %v1323, %v1862
    %v1864 = vand.u32 %v1863, 4294901760
    %1865 = vmatmul.mubr.f32.gmra.mxu0 %v1864
    %v1866 = vpop.f32.mrf.mxu0
    %v1867 = vadd.f32 %v1760, %v1866
    %v1868 = vpop.f32.mrf.mxu0
    %v1869 = vadd.f32 %v1762, %v1868
    %1870 = vdwg.mxu0
    %1871 = vmatprep.subr.mxu0 0.0
    %1872 = vmatpush1.msra.mxu0 0.0
    %1873 = vmatprep.subr.mxu0 0.0
    %1874 = vmatpush1.msra.mxu0 0.0
    %1875 = vmatprep.subr.mxu0 0.0
    %1876 = vmatpush1.msra.mxu0 0.0
    %1877 = vmatprep.subr.mxu0 0.0
    %1878 = vmatpush1.msra.mxu0 0.0
    %v1879 = vand.u32 %v1303, 4294901760
    %v1880 = vsub.f32 %v1303, %v1879
    %v1881 = vand.u32 %v1880, 4294901760
    %1882 = vmatprep.subr.mxu0 %v1881
    %v1883 = vand.u32 %v1302, 4294901760
    %v1884 = vsub.f32 %v1302, %v1883
    %v1885 = vand.u32 %v1884, 4294901760
    %1886 = vmatpush1.msra.mxu0 %v1885
    %v1887 = vand.u32 %v1301, 4294901760
    %v1888 = vsub.f32 %v1301, %v1887
    %v1889 = vand.u32 %v1888, 4294901760
    %1890 = vmatprep.subr.mxu0 %v1889
    %v1891 = vand.u32 %v1300, 4294901760
    %v1892 = vsub.f32 %v1300, %v1891
    %v1893 = vand.u32 %v1892, 4294901760
    %1894 = vmatpush1.msra.mxu0 %v1893
    %v1895 = vand.u32 %v1299, 4294901760
    %v1896 = vsub.f32 %v1299, %v1895
    %v1897 = vand.u32 %v1896, 4294901760
    %1898 = vmatprep.subr.mxu0 %v1897
    %v1899 = vand.u32 %v1298, 4294901760
    %v1900 = vsub.f32 %v1298, %v1899
    %v1901 = vand.u32 %v1900, 4294901760
    %1902 = vmatpush1.msra.mxu0 %v1901
    %v1903 = vand.u32 %v1297, 4294901760
    %v1904 = vsub.f32 %v1297, %v1903
    %v1905 = vand.u32 %v1904, 4294901760
    %1906 = vmatprep.subr.mxu0 %v1905
    %v1907 = vand.u32 %v1296, 4294901760
    %v1908 = vsub.f32 %v1296, %v1907
    %v1909 = vand.u32 %v1908, 4294901760
    %1910 = vmatpush1.msra.mxu0 %v1909
    %v1911 = vand.u32 %v1295, 4294901760
    %v1912 = vsub.f32 %v1295, %v1911
    %v1913 = vand.u32 %v1912, 4294901760
    %1914 = vmatprep.subr.mxu0 %v1913
    %v1915 = vand.u32 %v1294, 4294901760
    %v1916 = vsub.f32 %v1294, %v1915
    %v1917 = vand.u32 %v1916, 4294901760
    %1918 = vmatpush1.msra.mxu0 %v1917
    %v1919 = vand.u32 %v1293, 4294901760
    %v1920 = vsub.f32 %v1293, %v1919
    %v1921 = vand.u32 %v1920, 4294901760
    %1922 = vmatprep.subr.mxu0 %v1921
    %v1923 = vand.u32 %v1292, 4294901760
    %v1924 = vsub.f32 %v1292, %v1923
    %v1925 = vand.u32 %v1924, 4294901760
    %1926 = vmatpush1.msra.mxu0 %v1925
    %v1927 = vand.u32 %v1291, 4294901760
    %v1928 = vsub.f32 %v1291, %v1927
    %v1929 = vand.u32 %v1928, 4294901760
    %1930 = vmatprep.subr.mxu0 %v1929
    %v1931 = vand.u32 %v1290, 4294901760
    %v1932 = vsub.f32 %v1290, %v1931
    %v1933 = vand.u32 %v1932, 4294901760
    %1934 = vmatpush1.msra.mxu0 %v1933
    %v1935 = vand.u32 %v1289, 4294901760
    %v1936 = vsub.f32 %v1289, %v1935
    %v1937 = vand.u32 %v1936, 4294901760
    %1938 = vmatprep.subr.mxu0 %v1937
    %v1939 = vand.u32 %v1288, 4294901760
    %v1940 = vsub.f32 %v1288, %v1939
    %v1941 = vand.u32 %v1940, 4294901760
    %1942 = vmatpush1.msra.mxu0 %v1941
    %v1943 = vand.u32 %v1287, 4294901760
    %v1944 = vsub.f32 %v1287, %v1943
    %v1945 = vand.u32 %v1944, 4294901760
    %1946 = vmatprep.subr.mxu0 %v1945
    %v1947 = vand.u32 %v1286, 4294901760
    %v1948 = vsub.f32 %v1286, %v1947
    %v1949 = vand.u32 %v1948, 4294901760
    %1950 = vmatpush1.msra.mxu0 %v1949
    %v1951 = vand.u32 %v1285, 4294901760
    %v1952 = vsub.f32 %v1285, %v1951
    %v1953 = vand.u32 %v1952, 4294901760
    %1954 = vmatprep.subr.mxu0 %v1953
    %v1955 = vand.u32 %v1284, 4294901760
    %v1956 = vsub.f32 %v1284, %v1955
    %v1957 = vand.u32 %v1956, 4294901760
    %1958 = vmatpush1.msra.mxu0 %v1957
    %v1959 = vand.u32 %v1283, 4294901760
    %v1960 = vsub.f32 %v1283, %v1959
    %v1961 = vand.u32 %v1960, 4294901760
    %1962 = vmatprep.subr.mxu0 %v1961
    %v1963 = vand.u32 %v1282, 4294901760
    %v1964 = vsub.f32 %v1282, %v1963
    %v1965 = vand.u32 %v1964, 4294901760
    %1966 = vmatpush1.msra.mxu0 %v1965
    %v1967 = vand.u32 %v1281, 4294901760
    %v1968 = vsub.f32 %v1281, %v1967
    %v1969 = vand.u32 %v1968, 4294901760
    %1970 = vmatprep.subr.mxu0 %v1969
    %v1971 = vand.u32 %v1280, 4294901760
    %v1972 = vsub.f32 %v1280, %v1971
    %v1973 = vand.u32 %v1972, 4294901760
    %1974 = vmatpush1.msra.mxu0 %v1973
    %1975 = vmatprep.subr.mxu0 0.0
    %1976 = vmatpush2.msra.mxu0 0.0
    %1977 = vmatprep.subr.mxu0 0.0
    %1978 = vmatpush2.msra.mxu0 0.0
    %1979 = vmatprep.subr.mxu0 0.0
    %1980 = vmatpush2.msra.mxu0 0.0
    %1981 = vmatprep.subr.mxu0 0.0
    %1982 = vmatpush2.msra.mxu0 0.0
    %1983 = vmatprep.subr.mxu0 0.0
    %1984 = vmatpush2.msra.mxu0 0.0
    %1985 = vmatprep.subr.mxu0 0.0
    %1986 = vmatpush2.msra.mxu0 0.0
    %1987 = vmatprep.subr.mxu0 0.0
    %1988 = vmatpush2.msra.mxu0 0.0
    %1989 = vmatprep.subr.mxu0 0.0
    %1990 = vmatpush2.msra.mxu0 0.0
    %1991 = vmatprep.subr.mxu0 0.0
    %1992 = vmatpush2.msra.mxu0 0.0
    %1993 = vmatprep.subr.mxu0 0.0
    %1994 = vmatpush2.msra.mxu0 0.0
    %1995 = vmatprep.subr.mxu0 0.0
    %1996 = vmatpush2.msra.mxu0 0.0
    %1997 = vmatprep.subr.mxu0 0.0
    %1998 = vmatpush2.msra.mxu0 0.0
    %1999 = vmatprep.subr.mxu0 0.0
    %2000 = vmatpush2.msra.mxu0 0.0
    %2001 = vmatprep.subr.mxu0 0.0
    %2002 = vmatpush2.msra.mxu0 0.0
    %2003 = vmatprep.subr.mxu0 0.0
    %2004 = vmatpush2.msra.mxu0 0.0
    %2005 = vmatprep.subr.mxu0 0.0
    %2006 = vmatpush2.msra.mxu0 0.0
    %2007 = vmatprep.mubr.f32.mxu0 0.0
    %v2008 = vand.u32 %v1320, 4294901760
    %2009 = vmatmul.mubr.f32.gmra.mxu0 %v2008
    %v2010 = vpop.f32.mrf.mxu0
    %v2011 = vadd.f32 %v1858, %v2010
    %v2012 = vpop.f32.mrf.mxu0
    %v2013 = vadd.f32 %v1860, %v2012
    %2014 = vmatprep.mubr.f32.mxu0 0.0
    %v2015 = vand.u32 %v1323, 4294901760
    %2016 = vmatmul.mubr.f32.gmra.mxu0 %v2015
    %v2017 = vpop.f32.mrf.mxu0
    %v2018 = vadd.f32 %v1867, %v2017
    %v2019 = vpop.f32.mrf.mxu0
    %v2020 = vadd.f32 %v1869, %v2019
    %2021 = vdwg.mxu0
    %2022 = vmatprep.subr.mxu0 0.0
    %2023 = vmatpush1.msra.mxu0 0.0
    %2024 = vmatprep.subr.mxu0 0.0
    %2025 = vmatpush1.msra.mxu0 0.0
    %2026 = vmatprep.subr.mxu0 0.0
    %2027 = vmatpush1.msra.mxu0 0.0
    %2028 = vmatprep.subr.mxu0 0.0
    %2029 = vmatpush1.msra.mxu0 0.0
    %v2030 = vand.u32 %v1303, 4294901760
    %2031 = vmatprep.subr.mxu0 %v2030
    %v2032 = vand.u32 %v1302, 4294901760
    %2033 = vmatpush1.msra.mxu0 %v2032
    %v2034 = vand.u32 %v1301, 4294901760
    %2035 = vmatprep.subr.mxu0 %v2034
    %v2036 = vand.u32 %v1300, 4294901760
    %2037 = vmatpush1.msra.mxu0 %v2036
    %v2038 = vand.u32 %v1299, 4294901760
    %2039 = vmatprep.subr.mxu0 %v2038
    %v2040 = vand.u32 %v1298, 4294901760
    %2041 = vmatpush1.msra.mxu0 %v2040
    %v2042 = vand.u32 %v1297, 4294901760
    %2043 = vmatprep.subr.mxu0 %v2042
    %v2044 = vand.u32 %v1296, 4294901760
    %2045 = vmatpush1.msra.mxu0 %v2044
    %v2046 = vand.u32 %v1295, 4294901760
    %2047 = vmatprep.subr.mxu0 %v2046
    %v2048 = vand.u32 %v1294, 4294901760
    %2049 = vmatpush1.msra.mxu0 %v2048
    %v2050 = vand.u32 %v1293, 4294901760
    %2051 = vmatprep.subr.mxu0 %v2050
    %v2052 = vand.u32 %v1292, 4294901760
    %2053 = vmatpush1.msra.mxu0 %v2052
    %v2054 = vand.u32 %v1291, 4294901760
    %2055 = vmatprep.subr.mxu0 %v2054
    %v2056 = vand.u32 %v1290, 4294901760
    %2057 = vmatpush1.msra.mxu0 %v2056
    %v2058 = vand.u32 %v1289, 4294901760
    %2059 = vmatprep.subr.mxu0 %v2058
    %v2060 = vand.u32 %v1288, 4294901760
    %2061 = vmatpush1.msra.mxu0 %v2060
    %v2062 = vand.u32 %v1287, 4294901760
    %2063 = vmatprep.subr.mxu0 %v2062
    %v2064 = vand.u32 %v1286, 4294901760
    %2065 = vmatpush1.msra.mxu0 %v2064
    %v2066 = vand.u32 %v1285, 4294901760
    %2067 = vmatprep.subr.mxu0 %v2066
    %v2068 = vand.u32 %v1284, 4294901760
    %2069 = vmatpush1.msra.mxu0 %v2068
    %v2070 = vand.u32 %v1283, 4294901760
    %2071 = vmatprep.subr.mxu0 %v2070
    %v2072 = vand.u32 %v1282, 4294901760
    %2073 = vmatpush1.msra.mxu0 %v2072
    %v2074 = vand.u32 %v1281, 4294901760
    %2075 = vmatprep.subr.mxu0 %v2074
    %v2076 = vand.u32 %v1280, 4294901760
    %2077 = vmatpush1.msra.mxu0 %v2076
    %2078 = vmatprep.subr.mxu0 0.0
    %2079 = vmatpush2.msra.mxu0 0.0
    %2080 = vmatprep.subr.mxu0 0.0
    %2081 = vmatpush2.msra.mxu0 0.0
    %2082 = vmatprep.subr.mxu0 0.0
    %2083 = vmatpush2.msra.mxu0 0.0
    %2084 = vmatprep.subr.mxu0 0.0
    %2085 = vmatpush2.msra.mxu0 0.0
    %2086 = vmatprep.subr.mxu0 0.0
    %2087 = vmatpush2.msra.mxu0 0.0
    %2088 = vmatprep.subr.mxu0 0.0
    %2089 = vmatpush2.msra.mxu0 0.0
    %2090 = vmatprep.subr.mxu0 0.0
    %2091 = vmatpush2.msra.mxu0 0.0
    %2092 = vmatprep.subr.mxu0 0.0
    %2093 = vmatpush2.msra.mxu0 0.0
    %2094 = vmatprep.subr.mxu0 0.0
    %2095 = vmatpush2.msra.mxu0 0.0
    %2096 = vmatprep.subr.mxu0 0.0
    %2097 = vmatpush2.msra.mxu0 0.0
    %2098 = vmatprep.subr.mxu0 0.0
    %2099 = vmatpush2.msra.mxu0 0.0
    %2100 = vmatprep.subr.mxu0 0.0
    %2101 = vmatpush2.msra.mxu0 0.0
    %2102 = vmatprep.subr.mxu0 0.0
    %2103 = vmatpush2.msra.mxu0 0.0
    %2104 = vmatprep.subr.mxu0 0.0
    %2105 = vmatpush2.msra.mxu0 0.0
    %2106 = vmatprep.subr.mxu0 0.0
    %2107 = vmatpush2.msra.mxu0 0.0
    %2108 = vmatprep.subr.mxu0 0.0
    %2109 = vmatpush2.msra.mxu0 0.0
    %2110 = vmatprep.mubr.f32.mxu0 0.0
    %v2111 = vand.u32 %v1320, 4294901760
    %2112 = vmatmul.mubr.f32.gmra.mxu0 %v2111
    %v2113 = vpop.f32.mrf.mxu0
    %v2114 = vadd.f32 %v2011, %v2113
    %v2115 = vpop.f32.mrf.mxu0
    %v2116 = vadd.f32 %v2013, %v2115
    %2117 = vmatprep.mubr.f32.mxu0 0.0
    %v2118 = vand.u32 %v1323, 4294901760
    %2119 = vmatmul.mubr.f32.gmra.mxu0 %v2118
    %v2120 = vpop.f32.mrf.mxu0
    %v2121 = vadd.f32 %v2018, %v2120
    %v2122 = vpop.f32.mrf.mxu0
    %v2123 = vadd.f32 %v2020, %v2122
    %2124 = vdwg.mxu0
    %v2125 = vadd.f32 %v2114, %v2121
    %v2126 = vrot.slane %v2125, 4
    %v2127 = vadd.f32 %v2125, %v2126
    %v2128 = vrot.slane %v2127, 2
    %v2129 = vadd.f32 %v2127, %v2128
    %v2130 = vrot.slane %v2129, 1
    %v2131 = vadd.f32 %v2129, %v2130
    %v2132 = vadd.f32 %v2116, %v2123
    %v2133 = vrot.slane %v2132, 4
    %v2134 = vadd.f32 %v2132, %v2133
    %v2135 = vrot.slane %v2134, 2
    %v2136 = vadd.f32 %v2134, %v2135
    %v2137 = vrot.slane %v2136, 1
    %v2138 = vadd.f32 %v2136, %v2137
    %v2139 = vmul.f32 %v2131, 0.0625
    %v2140 = vmul.f32 %v2138, 0.0625
    %v2141 = vsub.f32 %v2114, %v2139
    %v2142 = vsub.f32 %v2116, %v2140
    %v2143 = vsub.f32 %v2121, %v2139
    %v2144 = vsub.f32 %v2123, %v2140
    %v2145 = vmul.f32 %v2141, %v2141
    %v2146 = vmul.f32 %v2142, %v2142
    %v2147 = vmul.f32 %v2143, %v2143
    %v2148 = vmul.f32 %v2144, %v2144
    %v2149 = vadd.f32 %v2145, %v2147
    %v2150 = vrot.slane %v2149, 4
    %v2151 = vadd.f32 %v2149, %v2150
    %v2152 = vrot.slane %v2151, 2
    %v2153 = vadd.f32 %v2151, %v2152
    %v2154 = vrot.slane %v2153, 1
    %v2155 = vadd.f32 %v2153, %v2154
    %v2156 = vadd.f32 %v2146, %v2148
    %v2157 = vrot.slane %v2156, 4
    %v2158 = vadd.f32 %v2156, %v2157
    %v2159 = vrot.slane %v2158, 2
    %v2160 = vadd.f32 %v2158, %v2159
    %v2161 = vrot.slane %v2160, 1
    %v2162 = vadd.f32 %v2160, %v2161
    %v2163 = vmul.f32 %v2155, 0.0625
    %v2164 = vmul.f32 %v2162, 0.0625
    %v2165 = vadd.f32 %v2163, 1e-05
    %v2166 = vadd.f32 %v2164, 1e-05
    %v2167 = vrsqrt.pop %v2165
    %v2168 = vrsqrt.pop %v2166
    %v2169 = vmul.f32 %v2141, %v2167
    %v2170 = vmul.f32 %v2142, %v2168
    %v2171 = vmul.f32 %v2143, %v2167
    %v2172 = vmul.f32 %v2144, %v2168
    %2173 = vset.pattern.permute.xlu0 1
    %2174 = vperm.xlu0 %2173, %v1306
    %v2175 = vpop.permute.xlu0 %2174
    %2177 = vset.pattern.permute.xlu0 1
    %2178 = vperm.xlu0 %2177, %v1307
    %v2179 = vpop.permute.xlu0 %2178
    %v2181 = vmul.f32 %v2169, %v2175
    %v2182 = vmul.f32 %v2170, %v2175
    %v2183 = vmul.f32 %v2171, %v2179
    %v2184 = vmul.f32 %v2172, %v2179
    %2185 = vset.pattern.permute.xlu0 2
    %2186 = vperm.xlu0 %2185, %v1306
    %v2187 = vpop.permute.xlu0 %2186
    %2189 = vset.pattern.permute.xlu0 2
    %2190 = vperm.xlu0 %2189, %v1307
    %v2191 = vpop.permute.xlu0 %2190
    %v2193 = vadd.f32 %v2181, %v2187
    %v2194 = vadd.f32 %v2182, %v2187
    %v2195 = vadd.f32 %v2183, %v2191
    %v2196 = vadd.f32 %v2184, %v2191
    %2197 = vst [vmem:[#allocation2] sm:$0xff] %v2193
    %2198 = vst [vmem:[#allocation2 + $0x8] sm:$0xff] %v2194
    %2199 = vst [vmem:[#allocation2 + $0x10] sm:$0xff] %v2195
    %2200 = vst [vmem:[#allocation2 + $0x18] sm:$0xff] %v2196
    // Predicated region
    $region22: #{_forward.1} parent=1 // pred_check
      _
    $region23: #{_forward.1} parent=1 // pred_check_branch
      %2202 = sbr.rel (0) target = $region25
    $region24: #{_forward.1} parent=1 // pred_region
      %s2204 = ssub.s32 512, 512
      %2205 = vsyncadd [#allocation3], %s2204
      %s2206 = sshll.u32 [#allocation2], 4
      %s2207 = int_to_ptr.vmem [resolvable:$true] %s2206
      %2212 = dma.vmem_to_hbm [thread:$0]  %s2207, 512, %s5, [#allocation3], 256, 256, 16
    $region25: #{_forward.1} parent=1 // pred_fallthru
      _
    // Predicated region
    $region26: #{_forward.1} parent=1 // pred_check
      _
    $region27: #{_forward.1} parent=1 // pred_check_branch
      %2214 = sbr.rel (0) target = $region29
    $region28: #{_forward.1} parent=1 // pred_region
      %2215 = dma.done [#allocation3], 512
    $region29: #{_forward.1} parent=1 // pred_fallthru
      _
    %2216 = vsyncpa [#allocation3], 1

</llo_original>
